<compile_context>
chip_gen: v7x
topology: tpu7x:2x2x1
jax: 0.10.0
libtpu: 0.0.40
codegen_flags: <defaults>
</compile_context>

<pallas_src>
import numpy as np
import jax
import jax.numpy as jnp
from jax import lax
from jax.experimental import pallas as pl
from jax.experimental.pallas import tpu as pltpu

# TODO(synk): UniformAffineQuantizer source not provided; assuming standard
# asymmetric min/max uniform-affine fake-quant with n_bits = 4 and
# group_size == in_features (per-output-row params), unclamped zero_point.
N_BITS = 4
QMAX = float(2 ** N_BITS - 1)


def _round_up(a, b):
    return ((a + b - 1) // b) * b


def _pick_tile(dim_padded, requested, align):
    """Largest multiple of `align` that divides `dim_padded` and is <= requested."""
    t = min(_round_up(requested, align), dim_padded)
    t = max((t // align) * align, align)
    while t > align and dim_padded % t != 0:
        t -= align
    return t


# ---------------------------------------------------------------------------
# Offline weight quantization + layout/padding (done once per weight).
# ---------------------------------------------------------------------------
def prepare_quant_linear(weight, bias, *, tn=512, tk=512):
    """weight: (N, K) f32; bias: (N,) or None.

    Returns a params dict with:
      codes : (Np, Kp) int8, 4-bit codes in [0, 15], zero-padded
      scale : (1, Np) f32 per-row scale
      szp   : (1, Np) f32 per-row scale * zero_point
      bias  : (1, Np) f32
      n, k, tn, tk : logical dims and chosen weight-side tile sizes
    """
    N, K = weight.shape
    w = weight.astype(jnp.float32)
    wmin = jnp.min(w, axis=-1, keepdims=True)
    wmax = jnp.max(w, axis=-1, keepdims=True)
    scale = jnp.maximum(wmax - wmin, 1e-5) / QMAX            # (N, 1)
    zero_point = jnp.round(-wmin / scale)                    # (N, 1)
    codes = jnp.clip(jnp.round(w / scale) + zero_point, 0.0, QMAX).astype(jnp.int8)

    Np = _round_up(N, 128)
    Kp = _round_up(K, 128)
    TN = _pick_tile(Np, tn, 128)
    TK = _pick_tile(Kp, tk, 128)

    codes_p = jnp.pad(codes, ((0, Np - N), (0, Kp - K)))
    scale_row = jnp.pad(scale.reshape(1, N), ((0, 0), (0, Np - N)))
    szp_row = jnp.pad((scale * zero_point).reshape(1, N), ((0, 0), (0, Np - N)))
    if bias is None:
        bias = jnp.zeros((N,), jnp.float32)
    bias_row = jnp.pad(bias.astype(jnp.float32).reshape(1, N), ((0, 0), (0, Np - N)))

    return dict(codes=codes_p, scale=scale_row, szp=szp_row, bias=bias_row,
                n=N, k=K, tn=TN, tk=TK)


# ---------------------------------------------------------------------------
# Pallas kernel: tiled  x @ codes^T  on the MXU, affine correction in epilogue.
# ---------------------------------------------------------------------------
def quant_linear_kernel(x_ref, wq_ref, scale_ref, szp_ref, b_ref, o_ref,
                        acc_ref, xsum_ref):
    k = pl.program_id(2)

    @pl.when(k == 0)
    def _():
        acc_ref[...] = jnp.zeros_like(acc_ref)
        xsum_ref[...] = jnp.zeros_like(xsum_ref)

    x_bf = x_ref[...]                           # (TM, TK) bf16
    w_bf = wq_ref[...].astype(jnp.bfloat16)     # codes 0..15 are exact in bf16

    # (TM, TK) . (TN, TK) contracted on the shared last (lane) dim -> (TM, TN).
    acc_ref[...] += lax.dot_general(
        x_bf, w_bf,
        dimension_numbers=(((1,), (1,)), ((), ())),
        preferred_element_type=jnp.float32)

    # Row-sum of x for the hoisted zero-point correction (f32, exact for the
    # zero-padded K columns).
    xsum_ref[...] += jnp.sum(x_bf.astype(jnp.float32), axis=-1, keepdims=True)

    @pl.when(k == pl.num_programs(2) - 1)
    def _():
        y = (acc_ref[...] * scale_ref[...]
             - xsum_ref[...] * szp_ref[...]
             + b_ref[...])
        o_ref[...] = y.astype(o_ref.dtype)


# ---------------------------------------------------------------------------
# Forward wrapper: per-call x padding, grid construction, pallas_call.
# ---------------------------------------------------------------------------
def quant_linear_forward(x, params, *, tm=256):
    """x: (..., K); params: output of prepare_quant_linear."""
    lead = x.shape[:-1]
    K = x.shape[-1]
    assert K == params["k"], "in_features mismatch"
    N = params["n"]
    codes, scale, szp, bias = (params["codes"], params["scale"],
                               params["szp"], params["bias"])
    Np, Kp = codes.shape
    TN, TK = params["tn"], params["tk"]
    M = int(np.prod(lead)) if lead else 1
    out_dtype = x.dtype

    # bf16 MXU input (halves x HBM bytes; no-op if already bf16).
    x2 = x.reshape(M, K).astype(jnp.bfloat16)

    TM = min(tm, _round_up(M, 16))          # bf16 sublane tile is 16
    Mp = _round_up(M, TM)
    if (Mp, Kp) != (M, K):
        x2 = jnp.pad(x2, ((0, Mp - M), (0, Kp - K)))

    grid_m = Mp // TM
    grid_n = Np // TN
    # v7x has 2 TensorCores sharded over parallel grid axes: if both parallel
    # axes collapsed to 1 block, split TN so grid_n >= 2.
    if grid_m == 1 and grid_n == 1 and Np >= 256:
        TN = _pick_tile(Np, Np // 2, 128)
        grid_n = Np // TN
    grid = (grid_m, grid_n, Kp // TK)

    # Explicit VMEM budget (double-buffered tiles + scratch, with headroom),
    # capped below v7x's 64 MiB physical VMEM.
    out_itemsize = jnp.dtype(out_dtype).itemsize
    tile_bytes = (2 * TM * TK * 2            # x, double buffered, bf16
                  + 2 * TN * TK * 1          # weight codes, double buffered, int8
                  + 2 * TM * TN * out_itemsize  # output, double buffered
                  + TM * TN * 4              # f32 accumulator scratch
                  + TM * 128 * 4             # row-sum scratch (lane padded)
                  + 6 * TN * 4)              # scale / szp / bias rows
    vmem_limit = int(min(48 * 1024 * 1024, max(2 * tile_bytes, 16 * 1024 * 1024)))

    out = pl.pallas_call(
        quant_linear_kernel,
        out_shape=jax.ShapeDtypeStruct((Mp, Np), out_dtype),
        grid_spec=pltpu.PrefetchScalarGridSpec(
            num_scalar_prefetch=0,
            grid=grid,
            in_specs=[
                pl.BlockSpec((TM, TK), lambda i, j, k: (i, k)),   # activations (bf16)
                pl.BlockSpec((TN, TK), lambda i, j, k: (j, k)),   # int8 weight codes
                pl.BlockSpec((1, TN), lambda i, j, k: (0, j)),    # scale row
                pl.BlockSpec((1, TN), lambda i, j, k: (0, j)),    # scale*zp row
                pl.BlockSpec((1, TN), lambda i, j, k: (0, j)),    # bias row
            ],
            out_specs=pl.BlockSpec((TM, TN), lambda i, j, k: (i, j)),
            scratch_shapes=[pltpu.VMEM((TM, TN), jnp.float32),
                            pltpu.VMEM((TM, 1), jnp.float32)],
        ),
        compiler_params=pltpu.CompilerParams(
            dimension_semantics=("parallel", "parallel", "arbitrary"),
            vmem_limit_bytes=vmem_limit),
    )(x2, codes, scale, szp, bias)

    return out[:M, :N].reshape(*lead, N)


# ---------------------------------------------------------------------------
# References.
# ---------------------------------------------------------------------------
def reference_f32(x, weight, bias):
    """Original full-f32 semantics: fake-quant weight, then linear."""
    w = weight.astype(jnp.float32)
    wmin = jnp.min(w, axis=-1, keepdims=True)
    wmax = jnp.max(w, axis=-1, keepdims=True)
    scale = jnp.maximum(wmax - wmin, 1e-5) / QMAX
    zp = jnp.round(-wmin / scale)
    w_dq = (jnp.clip(jnp.round(w / scale) + zp, 0.0, QMAX) - zp) * scale
    return jnp.einsum("...k,nk->...n", x.astype(jnp.float32), w_dq) + bias


def reference_kernel_numerics(x, params):
    """Mirrors the kernel's bf16 MXU / f32 epilogue-correction path."""
    N, K = params["n"], params["k"]
    codes = params["codes"][:N, :K]
    scale = params["scale"][0, :N]
    szp = params["szp"][0, :N]
    bias = params["bias"][0, :N]
    x_bf = x.astype(jnp.bfloat16)
    acc = jnp.einsum("...k,nk->...n", x_bf, codes.astype(jnp.bfloat16),
                     preferred_element_type=jnp.float32)
    xsum = jnp.sum(x_bf.astype(jnp.float32), axis=-1, keepdims=True)
    return acc * scale - xsum * szp + bias


if __name__ == "__main__":
    in_features, out_features = 512, 512
    batch, seq = 2, 64

    key = jax.random.PRNGKey(0)
    kx, kw, kb = jax.random.split(key, 3)

    # nn.Linear-style init: U(-1/sqrt(in), 1/sqrt(in)) for weight and bias.
    bound = 1.0 / np.sqrt(in_features)
    weight = jax.random.uniform(kw, (out_features, in_features),
                                minval=-bound, maxval=bound, dtype=jnp.float32)
    bias = jax.random.uniform(kb, (out_features,),
                              minval=-bound, maxval=bound, dtype=jnp.float32)
    x = jax.random.normal(kx, (batch, seq, in_features), dtype=jnp.float32)

    # Offline weight pre-quantization + layout/padding (once per weight).
    params = prepare_quant_linear(weight, bias)

    y = quant_linear_forward(x, params)
    y = jax.block_until_ready(y)
    assert y.shape == (batch, seq, out_features)

    # Tight check against a reference mirroring the kernel's exact numerics.
    y_kn = reference_kernel_numerics(x, params)
    np.testing.assert_allclose(np.asarray(y), np.asarray(y_kn), rtol=1e-3, atol=1e-3)

    # Loose check against the original full-f32 fake-quant + linear semantics
    # (deviation is only the bf16 cast of the activations on the MXU path).
    y_f32 = reference_f32(x, weight, bias)
    np.testing.assert_allclose(np.asarray(y), np.asarray(y_f32), rtol=3e-2, atol=3e-2)

    print("KERNEL_OK")
</pallas_src>

<mosaic_0001>
module attributes {stable_mosaic.version = 11 : i64} {
  func.func @quant_linear_kernel(%arg0: i32, %arg1: i32, %arg2: i32, %arg3: memref<128x512xbf16, #tpu.memory_space<vmem>>, %arg4: memref<256x512xi8, #tpu.memory_space<vmem>>, %arg5: memref<1x256xf32, #tpu.memory_space<vmem>>, %arg6: memref<1x256xf32, #tpu.memory_space<vmem>>, %arg7: memref<1x256xf32, #tpu.memory_space<vmem>>, %arg8: memref<128x256xf32, #tpu.memory_space<vmem>>, %arg9: memref<128x256xf32, #tpu.memory_space<vmem>>, %arg10: memref<128x1xf32, #tpu.memory_space<vmem>>) attributes {dimension_semantics = [#tpu.dimension_semantics<parallel>, #tpu.dimension_semantics<parallel>, #tpu.dimension_semantics<arbitrary>], iteration_bounds = array<i64: 1, 2, 1>, scalar_prefetch = 0 : i64, scratch_operands = 2 : i64, tpu.core_type = #tpu.core_type<tc>, window_params = [{transform_indices = @transform_0, window_bounds = array<i64: 128, 512>}, {transform_indices = @transform_1, window_bounds = array<i64: 256, 512>}, {transform_indices = @transform_2, window_bounds = array<i64: 1, 256>}, {transform_indices = @transform_3, window_bounds = array<i64: 1, 256>}, {transform_indices = @transform_4, window_bounds = array<i64: 1, 256>}, {transform_indices = @transform_5, window_bounds = array<i64: 128, 256>}]} {
    %c0_i32 = arith.constant 0 : i32
    %0 = arith.cmpi eq, %arg2, %c0_i32 : i32
    %1 = arith.extui %0 : i1 to i32
    %c0_i32_0 = arith.constant 0 : i32
    %2 = arith.cmpi ne, %1, %c0_i32_0 : i32
    scf.if %2 {
      %cst_15 = arith.constant 0.000000e+00 : f32
      %19 = vector.broadcast %cst_15 : f32 to vector<128x256xf32>
      %c0_16 = arith.constant 0 : index
      %c0_17 = arith.constant 0 : index
      %20 = vector.load %arg9[%c0_16, %c0_17] : memref<128x256xf32, #tpu.memory_space<vmem>>, vector<128x256xf32>
      tpu.vector_store %arg9[%c0_16, %c0_17], %19 {strides = array<i32>} : memref<128x256xf32, #tpu.memory_space<vmem>>, vector<128x256xf32>,
      %cst_18 = arith.constant 0.000000e+00 : f32
      %21 = vector.broadcast %cst_18 : f32 to vector<128x1xf32>
      %c0_19 = arith.constant 0 : index
      %c0_20 = arith.constant 0 : index
      %22 = vector.load %arg10[%c0_19, %c0_20] : memref<128x1xf32, #tpu.memory_space<vmem>>, vector<128x1xf32>
      tpu.vector_store %arg10[%c0_19, %c0_20], %21 {strides = array<i32>} : memref<128x1xf32, #tpu.memory_space<vmem>>, vector<128x1xf32>,
    } else {
    }
    %c0 = arith.constant 0 : index
    %c0_1 = arith.constant 0 : index
    %3 = vector.load %arg3[%c0, %c0_1] : memref<128x512xbf16, #tpu.memory_space<vmem>>, vector<128x512xbf16>
    %c0_2 = arith.constant 0 : index
    %c0_3 = arith.constant 0 : index
    %4 = vector.load %arg4[%c0_2, %c0_3] : memref<256x512xi8, #tpu.memory_space<vmem>>, vector<256x512xi8>
    %5 = arith.sitofp %4 : vector<256x512xi8> to vector<256x512xbf16>
    %c0_4 = arith.constant 0 : index
    %c0_5 = arith.constant 0 : index
    %6 = vector.load %arg9[%c0_4, %c0_5] : memref<128x256xf32, #tpu.memory_space<vmem>>, vector<128x256xf32>
    %cst = arith.constant dense<0.000000e+00> : vector<128x256xf32>
    %7 = tpu.matmul %3, %5, %cst {dimension_numbers = #tpu.dot_dimension_numbers<[1], [1], [0], [0], [0, 0, 1, 0], [], []>} : vector<128x512xbf16>, vector<256x512xbf16>, vector<128x256xf32> -> vector<128x256xf32>
    %8 = arith.addf %6, %7 : vector<128x256xf32>
    %c0_6 = arith.constant 0 : index
    %c0_7 = arith.constant 0 : index
    %9 = vector.load %arg9[%c0_6, %c0_7] : memref<128x256xf32, #tpu.memory_space<vmem>>, vector<128x256xf32>
    tpu.vector_store %arg9[%c0_6, %c0_7], %8 {strides = array<i32>} : memref<128x256xf32, #tpu.memory_space<vmem>>, vector<128x256xf32>,
    %c0_8 = arith.constant 0 : index
    %c0_9 = arith.constant 0 : index
    %10 = vector.load %arg10[%c0_8, %c0_9] : memref<128x1xf32, #tpu.memory_space<vmem>>, vector<128x1xf32>
    %11 = arith.extf %3 : vector<128x512xbf16> to vector<128x512xf32>
    %cst_10 = arith.constant dense<0.000000e+00> : vector<128xf32>
    %12 = vector.multi_reduction <add>, %11, %cst_10 [1] : vector<128x512xf32> to vector<128xf32>
    %13 = vector.shape_cast %12 : vector<128xf32> to vector<128x1xf32>
    %14 = arith.addf %10, %13 : vector<128x1xf32>
    %c0_11 = arith.constant 0 : index
    %c0_12 = arith.constant 0 : index
    %15 = vector.load %arg10[%c0_11, %c0_12] : memref<128x1xf32, #tpu.memory_space<vmem>>, vector<128x1xf32>
    tpu.vector_store %arg10[%c0_11, %c0_12], %14 {strides = array<i32>} : memref<128x1xf32, #tpu.memory_space<vmem>>, vector<128x1xf32>,
    %c0_i32_13 = arith.constant 0 : i32
    %16 = arith.cmpi eq, %arg2, %c0_i32_13 : i32
    %17 = arith.extui %16 : i1 to i32
    %c0_i32_14 = arith.constant 0 : i32
    %18 = arith.cmpi ne, %17, %c0_i32_14 : i32
    scf.if %18 {
      %c0_15 = arith.constant 0 : index
      %c0_16 = arith.constant 0 : index
      %19 = vector.load %arg9[%c0_15, %c0_16] : memref<128x256xf32, #tpu.memory_space<vmem>>, vector<128x256xf32>
      %c0_17 = arith.constant 0 : index
      %c0_18 = arith.constant 0 : index
      %20 = vector.load %arg5[%c0_17, %c0_18] : memref<1x256xf32, #tpu.memory_space<vmem>>, vector<1x256xf32>
      %21 = vector.broadcast %20 : vector<1x256xf32> to vector<128x256xf32>
      %22 = arith.mulf %19, %21 : vector<128x256xf32>
      %c0_19 = arith.constant 0 : index
      %c0_20 = arith.constant 0 : index
      %23 = vector.load %arg10[%c0_19, %c0_20] : memref<128x1xf32, #tpu.memory_space<vmem>>, vector<128x1xf32>
      %c0_21 = arith.constant 0 : index
      %c0_22 = arith.constant 0 : index
      %24 = vector.load %arg6[%c0_21, %c0_22] : memref<1x256xf32, #tpu.memory_space<vmem>>, vector<1x256xf32>
      %25 = vector.broadcast %23 : vector<128x1xf32> to vector<128x256xf32>
      %26 = vector.broadcast %24 : vector<1x256xf32> to vector<128x256xf32>
      %27 = arith.mulf %25, %26 : vector<128x256xf32>
      %28 = arith.subf %22, %27 : vector<128x256xf32>
      %c0_23 = arith.constant 0 : index
      %c0_24 = arith.constant 0 : index
      %29 = vector.load %arg7[%c0_23, %c0_24] : memref<1x256xf32, #tpu.memory_space<vmem>>, vector<1x256xf32>
      %30 = vector.broadcast %29 : vector<1x256xf32> to vector<128x256xf32>
      %31 = arith.addf %28, %30 : vector<128x256xf32>
      %c0_25 = arith.constant 0 : index
      %c0_26 = arith.constant 0 : index
      %32 = vector.load %arg8[%c0_25, %c0_26] : memref<128x256xf32, #tpu.memory_space<vmem>>, vector<128x256xf32>
      tpu.vector_store %arg8[%c0_25, %c0_26], %31 {strides = array<i32>} : memref<128x256xf32, #tpu.memory_space<vmem>>, vector<128x256xf32>,
    } else {
    }
    return
  }
  func.func @transform_0(%arg0: i32, %arg1: i32, %arg2: i32) -> (i32, i32) {
    %c0_i32 = arith.constant 0 : i32
    return %arg0, %arg2 : i32, i32
  }
  func.func @transform_1(%arg0: i32, %arg1: i32, %arg2: i32) -> (i32, i32) {
    %c0_i32 = arith.constant 0 : i32
    return %arg1, %arg2 : i32, i32
  }
  func.func @transform_2(%arg0: i32, %arg1: i32, %arg2: i32) -> (i32, i32) {
    %c0_i32 = arith.constant 0 : i32
    %c0_i32_0 = arith.constant 0 : i32
    return %c0_i32, %arg1 : i32, i32
  }
  func.func @transform_3(%arg0: i32, %arg1: i32, %arg2: i32) -> (i32, i32) {
    %c0_i32 = arith.constant 0 : i32
    %c0_i32_0 = arith.constant 0 : i32
    return %c0_i32, %arg1 : i32, i32
  }
  func.func @transform_4(%arg0: i32, %arg1: i32, %arg2: i32) -> (i32, i32) {
    %c0_i32 = arith.constant 0 : i32
    %c0_i32_0 = arith.constant 0 : i32
    return %c0_i32, %arg1 : i32, i32
  }
  func.func @transform_5(%arg0: i32, %arg1: i32, %arg2: i32) -> (i32, i32) {
    %c0_i32 = arith.constant 0 : i32
    return %arg0, %arg1 : i32, i32
  }
}

</mosaic_0001>

<llo_original>
// kernel: tpu_custom_call.1
$region0: #{tpu_custom_call.1}
  #allocation0 [shape = 'u32[]', space=smem, size = 0x4, offset = 0x4, fixed_abs, tag = 'smem constant byte address 0x4 - core index']
  #allocation1 [shape = 'u32[144,128]{1,0:T(1,128)}', space=vmem, size = 0x12000, scoped, tag = 'internal scratch']
  #allocation2 [shape = 'f32[128,256]{1,0:T(8,128)}', space=vmem, size = 0x20000, scoped, tag = 'scratch operand']
  #allocation3 [shape = 'f32[128,1]{1,0:T(8,128)}', space=vmem, size = 0x10000, scoped, tag = 'scratch operand']
  %s0 = inlined_call_operand.hbm [shape: bf16[128,512], index: 0, kind: input, shape index: {}]
  %s1 = inlined_call_operand.hbm [shape: s8[512,512], index: 1, kind: input, shape index: {}]
  %s2 = inlined_call_operand.vmem [shape: f32[1,512], index: 2, kind: input, shape index: {}]
  %s3 = inlined_call_operand.vmem [shape: f32[1,512], index: 3, kind: input, shape index: {}]
  %s4 = inlined_call_operand.vmem [shape: f32[1,512], index: 4, kind: input, shape index: {}]
  %s5 = inlined_call_operand.hbm [shape: f32[128,512], index: 5, kind: output, shape index: {}]
  %s6 = sld [smem:[#allocation0]]
  $region69: #{tpu_custom_call.1} parent=0
    _
  %s8 = ssub.s32 1, %s6
  %s9 = scalar_select 0, %s8, %s6
  $region1: #{tpu_custom_call.1} parent=0
    #allocation4 [shape = 'u8[131072]{0}', space=vmem, size = 0x20000, scoped, tag = 'input window, operand 0, single buffered']
    #allocation5 [shape = 's32[2]{0}', space=sflag, size = 0x8, scoped, tag = 'scoped memory for tpu_custom_call.1']
    #allocation6 [shape = 's32[2]{0}', space=sflag, size = 0x8, scoped, tag = 'scoped memory for tpu_custom_call.1']
    #allocation7 [shape = 'u8[262144]{0}', space=vmem, size = 0x40000, scoped, tag = 'input window, operand 1']
    #allocation8 [shape = 's32[2]{0}', space=sflag, size = 0x8, scoped, tag = 'scoped memory for tpu_custom_call.1']
    #allocation9 [shape = 'u8[262144]{0}', space=vmem, size = 0x40000, scoped, tag = 'output window, operand 0']
    %10 = vsyncpa [#allocation5], 0
    %11 = vsyncpa [#allocation8], 0
    %s12 = scalar_lea.sflag [#allocation8], 1
    %13 = vsyncpa %s12, 0
    %14 = vsyncpa [#allocation6], 0
    %s15 = scalar_lea.sflag [#allocation6], 1
    %16 = vsyncpa %s15, 0
    loop: start=0, step=1, limit=4
    $region2: #{tpu_custom_call.1} parent=1 // loop_pre_header
      _
    $region3: #{tpu_custom_call.1} parent=1 // loop_header
      %s18 = sphi 0, %s22
      %p19 = scmp.ge.s32.totalorder %s18, 4
      %s25 = sphi 0, %s44
      %s26 = sphi 0, %s40
      %s27 = sphi 0, %s36
      %s28 = sphi 0, %s25
      %s29 = sphi 0, %s26
      %s30 = sphi 0, %s27
      %s31 = sphi 0, %s28
      %s32 = sphi 0, %s29
      %s33 = sphi 0, %s30
      %s49 = sphi 0, %s51
      %s52 = sphi 0, %s49
      %s53 = sphi 0, %s52
      %s69 = sphi 0, %s53
      %s77 = sphi 0, %s79
      %s80 = sphi 0, %s77
      %s81 = sphi 0, %s80
      %s97 = sphi 0, %s81
      %s103 = sphi 0, %s105
      %s106 = sphi 0, %s103
      %s107 = sphi 0, %s106
      %s123 = sphi 0, %s107
      %s129 = sphi 0, %s131
      %s132 = sphi 0, %s129
      %s133 = sphi 0, %s132
      %s149 = sphi 0, %s133
      %s155 = sphi 0, %s157
      %s158 = sphi 0, %s155
      %s159 = sphi 0, %s158
      %s175 = sphi 0, %s159
      %s183 = sphi 0, %s185
      %s186 = sphi 0, %s183
      %s187 = sphi 0, %s186
      %s203 = sphi 0, %s187
    $region4: #{tpu_custom_call.1} parent=1 // loop_header_branch
      %21 = sbr.rel (%p19) target = $region8
    $region5: #{tpu_custom_call.1} parent=1 // loop_body
      %s23 = ssub.s32 %s18, 1
      %s24 = ssub.s32 %s18, 2
      %s34 = sadd.s32 1, %s27
      %p35 = scmp.ge.s32.totalorder %s34, 1
      %s36 = scalar_select %p35, 0, %s34
      %s37 = sadd.s32 1, %s26
      %s38 = scalar_select %p35, %s37, %s26
      %p39 = scmp.ge.s32.totalorder %s38, 2
      %s40 = scalar_select %p39, 0, %s38
      %s41 = sadd.s32 1, %s25
      %s42 = scalar_select %p39, %s41, %s25
      %p43 = scmp.ge.s32.totalorder %s42, 1
      %s44 = scalar_select %p43, 0, %s42
      %s45 = ssub.s32 %s25, %s44
      %s46 = ssub.s32 %s27, %s36
      %s47 = sor.u32 %s45, %s46
      %p48 = scmp.eq.s32.totalorder %s47, 0
      %s50 = sadd.s32 %s49, 1
      %s51 = scalar_select %p48, %s49, %s50
      %p54 = pneg %p48
      %p55 = scmp.eq.s32.totalorder %s18, 1
      %p56 = por %p54, %p55
      %p57 = scmp.ne.s32.totalorder %s49, %s52
      %p58 = scmp.eq.s32.totalorder %s18, 0
      %p59 = por %p57, %p58
      %p60 = scmp.ne.s32.totalorder %s49, %s52
      %p61 = scmp.eq.s32.totalorder %s23, 1
      %p62 = por %p60, %p61
      %p63 = scmp.ne.s32.totalorder %s52, %s53
      %p64 = scmp.eq.s32.totalorder %s23, 0
      %p65 = por %p63, %p64
      %p66 = scmp.ne.s32.totalorder %s52, %s53
      %p67 = scmp.eq.s32.totalorder %s24, 1
      %p68 = por %p66, %p67
      %p70 = scmp.ne.s32.totalorder %s53, %s69
      %p71 = scmp.eq.s32.totalorder %s24, 0
      %p72 = por %p70, %p71
      %s73 = ssub.s32 %s26, %s40
      %s74 = ssub.s32 %s27, %s36
      %s75 = sor.u32 %s73, %s74
      %p76 = scmp.eq.s32.totalorder %s75, 0
      %s78 = sadd.s32 %s77, 1
      %s79 = scalar_select %p76, %s77, %s78
      %p82 = pneg %p76
      %p83 = scmp.eq.s32.totalorder %s18, 1
      %p84 = por %p82, %p83
      %p85 = scmp.ne.s32.totalorder %s77, %s80
      %p86 = scmp.eq.s32.totalorder %s18, 0
      %p87 = por %p85, %p86
      %p88 = scmp.ne.s32.totalorder %s77, %s80
      %p89 = scmp.eq.s32.totalorder %s23, 1
      %p90 = por %p88, %p89
      %p91 = scmp.ne.s32.totalorder %s80, %s81
      %p92 = scmp.eq.s32.totalorder %s23, 0
      %p93 = por %p91, %p92
      %p94 = scmp.ne.s32.totalorder %s80, %s81
      %p95 = scmp.eq.s32.totalorder %s24, 1
      %p96 = por %p94, %p95
      %p98 = scmp.ne.s32.totalorder %s81, %s97
      %p99 = scmp.eq.s32.totalorder %s24, 0
      %p100 = por %p98, %p99
      %s101 = ssub.s32 %s26, %s40
      %p102 = scmp.eq.s32.totalorder %s101, 0
      %s104 = sadd.s32 %s103, 1
      %s105 = scalar_select %p102, %s103, %s104
      %p108 = pneg %p102
      %p109 = scmp.eq.s32.totalorder %s18, 1
      %p110 = por %p108, %p109
      %p111 = scmp.ne.s32.totalorder %s103, %s106
      %p112 = scmp.eq.s32.totalorder %s18, 0
      %p113 = por %p111, %p112
      %p114 = scmp.ne.s32.totalorder %s103, %s106
      %p115 = scmp.eq.s32.totalorder %s23, 1
      %p116 = por %p114, %p115
      %p117 = scmp.ne.s32.totalorder %s106, %s107
      %p118 = scmp.eq.s32.totalorder %s23, 0
      %p119 = por %p117, %p118
      %p120 = scmp.ne.s32.totalorder %s106, %s107
      %p121 = scmp.eq.s32.totalorder %s24, 1
      %p122 = por %p120, %p121
      %p124 = scmp.ne.s32.totalorder %s107, %s123
      %p125 = scmp.eq.s32.totalorder %s24, 0
      %p126 = por %p124, %p125
      %s127 = ssub.s32 %s26, %s40
      %p128 = scmp.eq.s32.totalorder %s127, 0
      %s130 = sadd.s32 %s129, 1
      %s131 = scalar_select %p128, %s129, %s130
      %p134 = pneg %p128
      %p135 = scmp.eq.s32.totalorder %s18, 1
      %p136 = por %p134, %p135
      %p137 = scmp.ne.s32.totalorder %s129, %s132
      %p138 = scmp.eq.s32.totalorder %s18, 0
      %p139 = por %p137, %p138
      %p140 = scmp.ne.s32.totalorder %s129, %s132
      %p141 = scmp.eq.s32.totalorder %s23, 1
      %p142 = por %p140, %p141
      %p143 = scmp.ne.s32.totalorder %s132, %s133
      %p144 = scmp.eq.s32.totalorder %s23, 0
      %p145 = por %p143, %p144
      %p146 = scmp.ne.s32.totalorder %s132, %s133
      %p147 = scmp.eq.s32.totalorder %s24, 1
      %p148 = por %p146, %p147
      %p150 = scmp.ne.s32.totalorder %s133, %s149
      %p151 = scmp.eq.s32.totalorder %s24, 0
      %p152 = por %p150, %p151
      %s153 = ssub.s32 %s26, %s40
      %p154 = scmp.eq.s32.totalorder %s153, 0
      %s156 = sadd.s32 %s155, 1
      %s157 = scalar_select %p154, %s155, %s156
      %p160 = pneg %p154
      %p161 = scmp.eq.s32.totalorder %s18, 1
      %p162 = por %p160, %p161
      %p163 = scmp.ne.s32.totalorder %s155, %s158
      %p164 = scmp.eq.s32.totalorder %s18, 0
      %p165 = por %p163, %p164
      %p166 = scmp.ne.s32.totalorder %s155, %s158
      %p167 = scmp.eq.s32.totalorder %s23, 1
      %p168 = por %p166, %p167
      %p169 = scmp.ne.s32.totalorder %s158, %s159
      %p170 = scmp.eq.s32.totalorder %s23, 0
      %p171 = por %p169, %p170
      %p172 = scmp.ne.s32.totalorder %s158, %s159
      %p173 = scmp.eq.s32.totalorder %s24, 1
      %p174 = por %p172, %p173
      %p176 = scmp.ne.s32.totalorder %s159, %s175
      %p177 = scmp.eq.s32.totalorder %s24, 0
      %p178 = por %p176, %p177
      %s179 = ssub.s32 %s25, %s44
      %s180 = ssub.s32 %s26, %s40
      %s181 = sor.u32 %s179, %s180
      %p182 = scmp.eq.s32.totalorder %s181, 0
      %s184 = sadd.s32 %s183, 1
      %s185 = scalar_select %p182, %s183, %s184
      %p188 = pneg %p182
      %p189 = scmp.eq.s32.totalorder %s18, 1
      %p190 = por %p188, %p189
      %p191 = scmp.ne.s32.totalorder %s183, %s186
      %p192 = scmp.eq.s32.totalorder %s18, 0
      %p193 = por %p191, %p192
      %p194 = scmp.ne.s32.totalorder %s183, %s186
      %p195 = scmp.eq.s32.totalorder %s23, 1
      %p196 = por %p194, %p195
      %p197 = scmp.ne.s32.totalorder %s186, %s187
      %p198 = scmp.eq.s32.totalorder %s23, 0
      %p199 = por %p197, %p198
      %p200 = scmp.ne.s32.totalorder %s186, %s187
      %p201 = scmp.eq.s32.totalorder %s24, 1
      %p202 = por %p200, %p201
      %p204 = scmp.ne.s32.totalorder %s187, %s203
      %p205 = scmp.eq.s32.totalorder %s24, 0
      %p206 = por %p204, %p205
      %p207 = scmp.le.s32.totalorder 1, %s18
      %p208 = scmp.lt.s32.totalorder %s18, 3
      %p209 = pnand %p207, %p208
      %p210 = pneg %p209
      // Predicated region
      $region9: #{tpu_custom_call.1} parent=5 // pred_check
        _
      $region10: #{tpu_custom_call.1} parent=5 // pred_check_branch
        %212 = sbr.rel (%p209) target = $region12
      $region11: #{tpu_custom_call.1} parent=5 // pred_region
        %s213 = ssub.s32 %s18, 1
        // Predicated region
        $region13: #{tpu_custom_call.1} parent=11 // pred_check
          %p214 = pneg %p65
        $region14: #{tpu_custom_call.1} parent=11 // pred_check_branch
          %216 = sbr.rel (%p214) target = $region16
        $region15: #{tpu_custom_call.1} parent=11 // pred_region
          %s217 = smul.u32 16, %s28
          %s218 = smul.u32 4, %s30
          %s220 = ssub.s32 4096, 4096
          %221 = vsyncadd [#allocation5], %s220
          %s222 = smul.addr %s217, 4
          %s223 = sadd.s32 %s218, %s222
          %s224 = smul.addr %s223, 64
          %s225 = scalar_lea.hbm %s0, %s224
          %s226 = sshll.u32 [#allocation4], 4
          %s227 = int_to_ptr.vmem [resolvable:$true] %s226
          %232 = dma.hbm_to_vmem [thread:$0]  %s225, 4096, %s227, [#allocation5], 256, 256, 16
        $region16: #{tpu_custom_call.1} parent=11 // pred_fallthru
          _
      $region12: #{tpu_custom_call.1} parent=5 // pred_fallthru
        _
      %p233 = scmp.lt.s32.totalorder %s18, 2
      // Predicated region
      $region17: #{tpu_custom_call.1} parent=5 // pred_check
        %p234 = pneg %p233
      $region18: #{tpu_custom_call.1} parent=5 // pred_check_branch
        %236 = sbr.rel (%p234) target = $region20
      $region19: #{tpu_custom_call.1} parent=5 // pred_region
        // Predicated region
        $region21: #{tpu_custom_call.1} parent=19 // pred_check
          %p237 = pneg %p87
        $region22: #{tpu_custom_call.1} parent=19 // pred_check_branch
          %239 = sbr.rel (%p237) target = $region24
        $region23: #{tpu_custom_call.1} parent=19 // pred_region
          %s240 = sand.u32 %s77, 1
          %s241 = scalar_lea.sflag [#allocation8], %s240
          %s242 = sand.u32 %s77, 1
          %s243 = smul.addr %s242, 256
          %s244 = scalar_lea.vmem [#allocation7], %s243
          %s245 = smul.u32 8, %s26
          %s246 = smul.u32 4, %s27
          %s248 = ssub.s32 4096, 4096
          %249 = vsyncadd %s241, %s248
          %s250 = smul.addr %s245, 4
          %s251 = sadd.s32 %s246, %s250
          %s252 = smul.addr %s251, 128
          %s253 = scalar_lea.hbm %s1, %s252
          %s254 = sshll.u32 %s244, 4
          %s255 = int_to_ptr.vmem [resolvable:$true] %s254
          %260 = dma.hbm_to_vmem [thread:$0]  %s253, 4096, %s255, %s241, 512, 512, 32
        $region24: #{tpu_custom_call.1} parent=19 // pred_fallthru
          _
        // Predicated region
        $region25: #{tpu_custom_call.1} parent=19 // pred_check
          %p261 = pneg %p113
        $region26: #{tpu_custom_call.1} parent=19 // pred_check_branch
          %263 = sbr.rel (%p261) target = $region28
        $region27: #{tpu_custom_call.1} parent=19 // pred_region
          %s264 = smul.u32 2, %s26
          %p265 = scmp.lt.s32.totalorder %s264, 3
          %s266 = scalar_select %p265, %s264, 3
          %s267 = scalar_lea.vmem %s2, %s266
          %s268 = smul.u32 2, %s26
        $region28: #{tpu_custom_call.1} parent=19 // pred_fallthru
          _
        // Predicated region
        $region29: #{tpu_custom_call.1} parent=19 // pred_check
          %p269 = pneg %p139
        $region30: #{tpu_custom_call.1} parent=19 // pred_check_branch
          %271 = sbr.rel (%p269) target = $region32
        $region31: #{tpu_custom_call.1} parent=19 // pred_region
          %s272 = smul.u32 2, %s26
          %p273 = scmp.lt.s32.totalorder %s272, 3
          %s274 = scalar_select %p273, %s272, 3
          %s275 = scalar_lea.vmem %s3, %s274
          %s276 = smul.u32 2, %s26
        $region32: #{tpu_custom_call.1} parent=19 // pred_fallthru
          _
        // Predicated region
        $region33: #{tpu_custom_call.1} parent=19 // pred_check
          %p277 = pneg %p165
        $region34: #{tpu_custom_call.1} parent=19 // pred_check_branch
          %279 = sbr.rel (%p277) target = $region36
        $region35: #{tpu_custom_call.1} parent=19 // pred_region
          %s280 = smul.u32 2, %s26
          %p281 = scmp.lt.s32.totalorder %s280, 3
          %s282 = scalar_select %p281, %s280, 3
          %s283 = scalar_lea.vmem %s4, %s282
          %s284 = smul.u32 2, %s26
        $region36: #{tpu_custom_call.1} parent=19 // pred_fallthru
          _
      $region20: #{tpu_custom_call.1} parent=5 // pred_fallthru
        _
      %p285 = scmp.le.s32.totalorder 1, %s18
      %p286 = scmp.lt.s32.totalorder %s18, 3
      %p287 = pnand %p285, %p286
      %p288 = pneg %p287
      // Predicated region
      $region37: #{tpu_custom_call.1} parent=5 // pred_check
        _
      $region38: #{tpu_custom_call.1} parent=5 // pred_check_branch
        %290 = sbr.rel (%p287) target = $region40
      $region39: #{tpu_custom_call.1} parent=5 // pred_region
        %s291 = ssub.s32 %s18, 1
        // Predicated region
        $region41: #{tpu_custom_call.1} parent=39 // pred_check
          %p292 = pneg %p65
        $region42: #{tpu_custom_call.1} parent=39 // pred_check_branch
          %294 = sbr.rel (%p292) target = $region44
        $region43: #{tpu_custom_call.1} parent=39 // pred_region
          %295 = dma.done [#allocation5], 4096
        $region44: #{tpu_custom_call.1} parent=39 // pred_fallthru
          _
        %s296 = sand.u32 %s80, 1
        %s297 = scalar_lea.sflag [#allocation8], %s296
        %s298 = sand.u32 %s80, 1
        %s299 = smul.addr %s298, 256
        %s300 = scalar_lea.vmem [#allocation7], %s299
        // Predicated region
        $region45: #{tpu_custom_call.1} parent=39 // pred_check
          %p301 = pneg %p93
        $region46: #{tpu_custom_call.1} parent=39 // pred_check_branch
          %303 = sbr.rel (%p301) target = $region48
        $region47: #{tpu_custom_call.1} parent=39 // pred_region
          %304 = dma.done %s297, 4096
        $region48: #{tpu_custom_call.1} parent=39 // pred_fallthru
          _
        %p305 = pneg %p65
        %p306 = pneg %p62
        %s307 = sand.u32 %s80, 1
        %s308 = scalar_lea.sflag [#allocation8], %s307
        %s309 = sand.u32 %s80, 1
        %s310 = smul.addr %s309, 256
        %s311 = scalar_lea.vmem [#allocation7], %s310
        %p312 = pneg %p93
        %p313 = pneg %p90
        %s314 = smul.u32 2, %s29
        %p315 = scmp.lt.s32.totalorder %s314, 3
        %s316 = scalar_select %p315, %s314, 3
        %s317 = scalar_lea.vmem %s2, %s316
        %p318 = pneg %p119
        %p319 = pneg %p116
        %s320 = smul.u32 2, %s29
        %p321 = scmp.lt.s32.totalorder %s320, 3
        %s322 = scalar_select %p321, %s320, 3
        %s323 = scalar_lea.vmem %s3, %s322
        %p324 = pneg %p145
        %p325 = pneg %p142
        %s326 = smul.u32 2, %s29
        %p327 = scmp.lt.s32.totalorder %s326, 3
        %s328 = scalar_select %p327, %s326, 3
        %s329 = scalar_lea.vmem %s4, %s328
        %p330 = pneg %p171
        %p331 = pneg %p168
        %p332 = pneg %p199
        %p333 = pneg %p196
        %s334 = sand.u32 %s186, 1
        %s335 = scalar_lea.sflag [#allocation6], %s334
        %s336 = sand.u32 %s186, 1
        %s337 = smul.addr %s336, 256
        %s338 = scalar_lea.vmem [#allocation9], %s337
        %s339 = smul.u32 16, %s28
        %s340 = smul.u32 4, %s30
        %s341 = smul.u32 8, %s29
        %s342 = smul.u32 4, %s30
        %s343 = smul.u32 2, %s29
        %p344 = scmp.lt.s32.totalorder %s343, 3
        %s345 = scalar_select %p344, %s343, 3
        %s346 = scalar_lea.vmem %s2, %s345
        %s347 = smul.u32 2, %s29
        %s348 = smul.u32 2, %s29
        %p349 = scmp.lt.s32.totalorder %s348, 3
        %s350 = scalar_select %p349, %s348, 3
        %s351 = scalar_lea.vmem %s3, %s350
        %s352 = smul.u32 2, %s29
        %s353 = smul.u32 2, %s29
        %p354 = scmp.lt.s32.totalorder %s353, 3
        %s355 = scalar_select %p354, %s353, 3
        %s356 = scalar_lea.vmem %s4, %s355
        %s357 = smul.u32 2, %s29
        %s358 = smul.u32 16, %s28
        %s359 = smul.u32 2, %s29
        %p360 = scmp.eq.s32.totalorder %s30, 0
        // Predicated region
        $region49: #{tpu_custom_call.1} parent=39 // pred_check
          %p361 = pneg %p360
        $region50: #{tpu_custom_call.1} parent=39 // pred_check_branch
          %363 = sbr.rel (%p361) target = $region52
        $region51: #{tpu_custom_call.1} parent=39 // pred_region
          %364 = vst [vmem:[#allocation2] sm:$0xff] 0.0
          %365 = vst [vmem:[#allocation2 + $0x8] sm:$0xff] 0.0
          %366 = vst [vmem:[#allocation2 + $0x10] sm:$0xff] 0.0
          %367 = vst [vmem:[#allocation2 + $0x18] sm:$0xff] 0.0
          %368 = vst [vmem:[#allocation2 + $0x20] sm:$0xff] 0.0
          %369 = vst [vmem:[#allocation2 + $0x28] sm:$0xff] 0.0
          %370 = vst [vmem:[#allocation2 + $0x30] sm:$0xff] 0.0
          %371 = vst [vmem:[#allocation2 + $0x38] sm:$0xff] 0.0
          %372 = vst [vmem:[#allocation2 + $0x40] sm:$0xff] 0.0
          %373 = vst [vmem:[#allocation2 + $0x48] sm:$0xff] 0.0
          %374 = vst [vmem:[#allocation2 + $0x50] sm:$0xff] 0.0
          %375 = vst [vmem:[#allocation2 + $0x58] sm:$0xff] 0.0
          %376 = vst [vmem:[#allocation2 + $0x60] sm:$0xff] 0.0
          %377 = vst [vmem:[#allocation2 + $0x68] sm:$0xff] 0.0
          %378 = vst [vmem:[#allocation2 + $0x70] sm:$0xff] 0.0
          %379 = vst [vmem:[#allocation2 + $0x78] sm:$0xff] 0.0
          %380 = vst [vmem:[#allocation2 + $0x80] sm:$0xff] 0.0
          %381 = vst [vmem:[#allocation2 + $0x88] sm:$0xff] 0.0
          %382 = vst [vmem:[#allocation2 + $0x90] sm:$0xff] 0.0
          %383 = vst [vmem:[#allocation2 + $0x98] sm:$0xff] 0.0
          %384 = vst [vmem:[#allocation2 + $0xa0] sm:$0xff] 0.0
          %385 = vst [vmem:[#allocation2 + $0xa8] sm:$0xff] 0.0
          %386 = vst [vmem:[#allocation2 + $0xb0] sm:$0xff] 0.0
          %387 = vst [vmem:[#allocation2 + $0xb8] sm:$0xff] 0.0
          %388 = vst [vmem:[#allocation2 + $0xc0] sm:$0xff] 0.0
          %389 = vst [vmem:[#allocation2 + $0xc8] sm:$0xff] 0.0
          %390 = vst [vmem:[#allocation2 + $0xd0] sm:$0xff] 0.0
          %391 = vst [vmem:[#allocation2 + $0xd8] sm:$0xff] 0.0
          %392 = vst [vmem:[#allocation2 + $0xe0] sm:$0xff] 0.0
          %393 = vst [vmem:[#allocation2 + $0xe8] sm:$0xff] 0.0
          %394 = vst [vmem:[#allocation2 + $0xf0] sm:$0xff] 0.0
          %395 = vst [vmem:[#allocation2 + $0xf8] sm:$0xff] 0.0
          %vm396 = vcmask 7168
          %397 = vst.msk [vmem:[#allocation3] sm:$0xff] %vm396, 0.0
          %398 = vst.msk [vmem:[#allocation3 + $0x8] sm:$0xff] %vm396, 0.0
          %399 = vst.msk [vmem:[#allocation3 + $0x10] sm:$0xff] %vm396, 0.0
          %400 = vst.msk [vmem:[#allocation3 + $0x18] sm:$0xff] %vm396, 0.0
          %401 = vst.msk [vmem:[#allocation3 + $0x20] sm:$0xff] %vm396, 0.0
          %402 = vst.msk [vmem:[#allocation3 + $0x28] sm:$0xff] %vm396, 0.0
          %403 = vst.msk [vmem:[#allocation3 + $0x30] sm:$0xff] %vm396, 0.0
          %404 = vst.msk [vmem:[#allocation3 + $0x38] sm:$0xff] %vm396, 0.0
          %405 = vst.msk [vmem:[#allocation3 + $0x40] sm:$0xff] %vm396, 0.0
          %406 = vst.msk [vmem:[#allocation3 + $0x48] sm:$0xff] %vm396, 0.0
          %407 = vst.msk [vmem:[#allocation3 + $0x50] sm:$0xff] %vm396, 0.0
          %408 = vst.msk [vmem:[#allocation3 + $0x58] sm:$0xff] %vm396, 0.0
          %409 = vst.msk [vmem:[#allocation3 + $0x60] sm:$0xff] %vm396, 0.0
          %410 = vst.msk [vmem:[#allocation3 + $0x68] sm:$0xff] %vm396, 0.0
          %411 = vst.msk [vmem:[#allocation3 + $0x70] sm:$0xff] %vm396, 0.0
          %412 = vst.msk [vmem:[#allocation3 + $0x78] sm:$0xff] %vm396, 0.0
        $region52: #{tpu_custom_call.1} parent=39 // pred_fallthru
          _
        %v413 = vld [vmem:[#allocation4] sm:$0xff]
        %v414 = vld [vmem:[#allocation4 + $0x8] sm:$0xff]
        %v415 = vld [vmem:[#allocation4 + $0x10] sm:$0xff]
        %v416 = vld [vmem:[#allocation4 + $0x18] sm:$0xff]
        %v417 = vld [vmem:[#allocation4 + $0x20] sm:$0xff]
        %v418 = vld [vmem:[#allocation4 + $0x28] sm:$0xff]
        %v419 = vld [vmem:[#allocation4 + $0x30] sm:$0xff]
        %v420 = vld [vmem:[#allocation4 + $0x38] sm:$0xff]
        %v421 = vld [vmem:[#allocation4 + $0x40] sm:$0xff]
        %v422 = vld [vmem:[#allocation4 + $0x48] sm:$0xff]
        %v423 = vld [vmem:[#allocation4 + $0x50] sm:$0xff]
        %v424 = vld [vmem:[#allocation4 + $0x58] sm:$0xff]
        %v425 = vld [vmem:[#allocation4 + $0x60] sm:$0xff]
        %v426 = vld [vmem:[#allocation4 + $0x68] sm:$0xff]
        %v427 = vld [vmem:[#allocation4 + $0x70] sm:$0xff]
        %v428 = vld [vmem:[#allocation4 + $0x78] sm:$0xff]
        %v429 = vld [vmem:[#allocation4 + $0x80] sm:$0xff]
        %v430 = vld [vmem:[#allocation4 + $0x88] sm:$0xff]
        %v431 = vld [vmem:[#allocation4 + $0x90] sm:$0xff]
        %v432 = vld [vmem:[#allocation4 + $0x98] sm:$0xff]
        %v433 = vld [vmem:[#allocation4 + $0xa0] sm:$0xff]
        %v434 = vld [vmem:[#allocation4 + $0xa8] sm:$0xff]
        %v435 = vld [vmem:[#allocation4 + $0xb0] sm:$0xff]
        %v436 = vld [vmem:[#allocation4 + $0xb8] sm:$0xff]
        %v437 = vld [vmem:[#allocation4 + $0xc0] sm:$0xff]
        %v438 = vld [vmem:[#allocation4 + $0xc8] sm:$0xff]
        %v439 = vld [vmem:[#allocation4 + $0xd0] sm:$0xff]
        %v440 = vld [vmem:[#allocation4 + $0xd8] sm:$0xff]
        %v441 = vld [vmem:[#allocation4 + $0xe0] sm:$0xff]
        %v442 = vld [vmem:[#allocation4 + $0xe8] sm:$0xff]
        %v443 = vld [vmem:[#allocation4 + $0xf0] sm:$0xff]
        %v444 = vld [vmem:[#allocation4 + $0xf8] sm:$0xff]
        %v445 = vld [vmem:[%s300] sm:$0xff]
        %v446 = vld [vmem:[%s300 + $0x8] sm:$0xff]
        %v447 = vld [vmem:[%s300 + $0x10] sm:$0xff]
        %v448 = vld [vmem:[%s300 + $0x18] sm:$0xff]
        %v449 = vld [vmem:[%s300 + $0x20] sm:$0xff]
        %v450 = vld [vmem:[%s300 + $0x28] sm:$0xff]
        %v451 = vld [vmem:[%s300 + $0x30] sm:$0xff]
        %v452 = vld [vmem:[%s300 + $0x38] sm:$0xff]
        %v453 = vld [vmem:[%s300 + $0x40] sm:$0xff]
        %v454 = vld [vmem:[%s300 + $0x48] sm:$0xff]
        %v455 = vld [vmem:[%s300 + $0x50] sm:$0xff]
        %v456 = vld [vmem:[%s300 + $0x58] sm:$0xff]
        %v457 = vld [vmem:[%s300 + $0x60] sm:$0xff]
        %v458 = vld [vmem:[%s300 + $0x68] sm:$0xff]
        %v459 = vld [vmem:[%s300 + $0x70] sm:$0xff]
        %v460 = vld [vmem:[%s300 + $0x78] sm:$0xff]
        %v461 = vld [vmem:[%s300 + $0x80] sm:$0xff]
        %v462 = vld [vmem:[%s300 + $0x88] sm:$0xff]
        %v463 = vld [vmem:[%s300 + $0x90] sm:$0xff]
        %v464 = vld [vmem:[%s300 + $0x98] sm:$0xff]
        %v465 = vld [vmem:[%s300 + $0xa0] sm:$0xff]
        %v466 = vld [vmem:[%s300 + $0xa8] sm:$0xff]
        %v467 = vld [vmem:[%s300 + $0xb0] sm:$0xff]
        %v468 = vld [vmem:[%s300 + $0xb8] sm:$0xff]
        %v469 = vld [vmem:[%s300 + $0xc0] sm:$0xff]
        %v470 = vld [vmem:[%s300 + $0xc8] sm:$0xff]
        %v471 = vld [vmem:[%s300 + $0xd0] sm:$0xff]
        %v472 = vld [vmem:[%s300 + $0xd8] sm:$0xff]
        %v473 = vld [vmem:[%s300 + $0xe0] sm:$0xff]
        %v474 = vld [vmem:[%s300 + $0xe8] sm:$0xff]
        %v475 = vld [vmem:[%s300 + $0xf0] sm:$0xff]
        %v476 = vld [vmem:[%s300 + $0xf8] sm:$0xff]
        %v477 = vunpack.c.l.s8.bf16 %v445
        %v478 = vunpack.c.l.s8.bf16 %v446
        %v479 = vunpack.c.l.s8.bf16 %v447
        %v480 = vunpack.c.l.s8.bf16 %v448
        %v481 = vunpack.c.h.s8.bf16 %v445
        %v482 = vunpack.c.h.s8.bf16 %v446
        %v483 = vunpack.c.h.s8.bf16 %v447
        %v484 = vunpack.c.h.s8.bf16 %v448
        %v485 = vunpack.c.l.s8.bf16 %v449
        %v486 = vunpack.c.l.s8.bf16 %v450
        %v487 = vunpack.c.l.s8.bf16 %v451
        %v488 = vunpack.c.l.s8.bf16 %v452
        %v489 = vunpack.c.h.s8.bf16 %v449
        %v490 = vunpack.c.h.s8.bf16 %v450
        %v491 = vunpack.c.h.s8.bf16 %v451
        %v492 = vunpack.c.h.s8.bf16 %v452
        %v493 = vunpack.c.l.s8.bf16 %v453
        %v494 = vunpack.c.l.s8.bf16 %v454
        %v495 = vunpack.c.l.s8.bf16 %v455
        %v496 = vunpack.c.l.s8.bf16 %v456
        %v497 = vunpack.c.h.s8.bf16 %v453
        %v498 = vunpack.c.h.s8.bf16 %v454
        %v499 = vunpack.c.h.s8.bf16 %v455
        %v500 = vunpack.c.h.s8.bf16 %v456
        %v501 = vunpack.c.l.s8.bf16 %v457
        %v502 = vunpack.c.l.s8.bf16 %v458
        %v503 = vunpack.c.l.s8.bf16 %v459
        %v504 = vunpack.c.l.s8.bf16 %v460
        %v505 = vunpack.c.h.s8.bf16 %v457
        %v506 = vunpack.c.h.s8.bf16 %v458
        %v507 = vunpack.c.h.s8.bf16 %v459
        %v508 = vunpack.c.h.s8.bf16 %v460
        %v509 = vunpack.c.l.s8.bf16 %v461
        %v510 = vunpack.c.l.s8.bf16 %v462
        %v511 = vunpack.c.l.s8.bf16 %v463
        %v512 = vunpack.c.l.s8.bf16 %v464
        %v513 = vunpack.c.h.s8.bf16 %v461
        %v514 = vunpack.c.h.s8.bf16 %v462
        %v515 = vunpack.c.h.s8.bf16 %v463
        %v516 = vunpack.c.h.s8.bf16 %v464
        %v517 = vunpack.c.l.s8.bf16 %v465
        %v518 = vunpack.c.l.s8.bf16 %v466
        %v519 = vunpack.c.l.s8.bf16 %v467
        %v520 = vunpack.c.l.s8.bf16 %v468
        %v521 = vunpack.c.h.s8.bf16 %v465
        %v522 = vunpack.c.h.s8.bf16 %v466
        %v523 = vunpack.c.h.s8.bf16 %v467
        %v524 = vunpack.c.h.s8.bf16 %v468
        %v525 = vunpack.c.l.s8.bf16 %v469
        %v526 = vunpack.c.l.s8.bf16 %v470
        %v527 = vunpack.c.l.s8.bf16 %v471
        %v528 = vunpack.c.l.s8.bf16 %v472
        %v529 = vunpack.c.h.s8.bf16 %v469
        %v530 = vunpack.c.h.s8.bf16 %v470
        %v531 = vunpack.c.h.s8.bf16 %v471
        %v532 = vunpack.c.h.s8.bf16 %v472
        %v533 = vunpack.c.l.s8.bf16 %v473
        %v534 = vunpack.c.l.s8.bf16 %v474
        %v535 = vunpack.c.l.s8.bf16 %v475
        %v536 = vunpack.c.l.s8.bf16 %v476
        %v537 = vunpack.c.h.s8.bf16 %v473
        %v538 = vunpack.c.h.s8.bf16 %v474
        %v539 = vunpack.c.h.s8.bf16 %v475
        %v540 = vunpack.c.h.s8.bf16 %v476
        %v541 = vld [vmem:[#allocation2] sm:$0xff]
        %v542 = vld [vmem:[#allocation2 + $0x8] sm:$0xff]
        %v543 = vld [vmem:[#allocation2 + $0x10] sm:$0xff]
        %v544 = vld [vmem:[#allocation2 + $0x18] sm:$0xff]
        %v545 = vld [vmem:[#allocation2 + $0x20] sm:$0xff]
        %v546 = vld [vmem:[#allocation2 + $0x28] sm:$0xff]
        %v547 = vld [vmem:[#allocation2 + $0x30] sm:$0xff]
        %v548 = vld [vmem:[#allocation2 + $0x38] sm:$0xff]
        %v549 = vld [vmem:[#allocation2 + $0x40] sm:$0xff]
        %v550 = vld [vmem:[#allocation2 + $0x48] sm:$0xff]
        %v551 = vld [vmem:[#allocation2 + $0x50] sm:$0xff]
        %v552 = vld [vmem:[#allocation2 + $0x58] sm:$0xff]
        %v553 = vld [vmem:[#allocation2 + $0x60] sm:$0xff]
        %v554 = vld [vmem:[#allocation2 + $0x68] sm:$0xff]
        %v555 = vld [vmem:[#allocation2 + $0x70] sm:$0xff]
        %v556 = vld [vmem:[#allocation2 + $0x78] sm:$0xff]
        %v557 = vld [vmem:[#allocation2 + $0x80] sm:$0xff]
        %v558 = vld [vmem:[#allocation2 + $0x88] sm:$0xff]
        %v559 = vld [vmem:[#allocation2 + $0x90] sm:$0xff]
        %v560 = vld [vmem:[#allocation2 + $0x98] sm:$0xff]
        %v561 = vld [vmem:[#allocation2 + $0xa0] sm:$0xff]
        %v562 = vld [vmem:[#allocation2 + $0xa8] sm:$0xff]
        %v563 = vld [vmem:[#allocation2 + $0xb0] sm:$0xff]
        %v564 = vld [vmem:[#allocation2 + $0xb8] sm:$0xff]
        %v565 = vld [vmem:[#allocation2 + $0xc0] sm:$0xff]
        %v566 = vld [vmem:[#allocation2 + $0xc8] sm:$0xff]
        %v567 = vld [vmem:[#allocation2 + $0xd0] sm:$0xff]
        %v568 = vld [vmem:[#allocation2 + $0xd8] sm:$0xff]
        %v569 = vld [vmem:[#allocation2 + $0xe0] sm:$0xff]
        %v570 = vld [vmem:[#allocation2 + $0xe8] sm:$0xff]
        %v571 = vld [vmem:[#allocation2 + $0xf0] sm:$0xff]
        %v572 = vld [vmem:[#allocation2 + $0xf8] sm:$0xff]
        %v605 = vunpack.c.l.b16 %v413
        %v606 = vunpack.c.h.b16 %v413
        %v607 = vunpack.c.l.b16 %v414
        %v608 = vunpack.c.h.b16 %v414
        %v609 = vunpack.c.l.b16 %v415
        %v610 = vunpack.c.h.b16 %v415
        %v611 = vunpack.c.l.b16 %v416
        %v612 = vunpack.c.h.b16 %v416
        %v613 = vunpack.c.l.b16 %v417
        %v614 = vunpack.c.h.b16 %v417
        %v615 = vunpack.c.l.b16 %v418
        %v616 = vunpack.c.h.b16 %v418
        %v617 = vunpack.c.l.b16 %v419
        %v618 = vunpack.c.h.b16 %v419
        %v619 = vunpack.c.l.b16 %v420
        %v620 = vunpack.c.h.b16 %v420
        %v621 = vunpack.c.l.b16 %v421
        %v622 = vunpack.c.h.b16 %v421
        %v623 = vunpack.c.l.b16 %v422
        %v624 = vunpack.c.h.b16 %v422
        %v625 = vunpack.c.l.b16 %v423
        %v626 = vunpack.c.h.b16 %v423
        %v627 = vunpack.c.l.b16 %v424
        %v628 = vunpack.c.h.b16 %v424
        %v629 = vunpack.c.l.b16 %v425
        %v630 = vunpack.c.h.b16 %v425
        %v631 = vunpack.c.l.b16 %v426
        %v632 = vunpack.c.h.b16 %v426
        %v633 = vunpack.c.l.b16 %v427
        %v634 = vunpack.c.h.b16 %v427
        %v635 = vunpack.c.l.b16 %v428
        %v636 = vunpack.c.h.b16 %v428
        %v637 = vunpack.c.l.b16 %v429
        %v638 = vunpack.c.h.b16 %v429
        %v639 = vunpack.c.l.b16 %v430
        %v640 = vunpack.c.h.b16 %v430
        %v641 = vunpack.c.l.b16 %v431
        %v642 = vunpack.c.h.b16 %v431
        %v643 = vunpack.c.l.b16 %v432
        %v644 = vunpack.c.h.b16 %v432
        %v645 = vunpack.c.l.b16 %v433
        %v646 = vunpack.c.h.b16 %v433
        %v647 = vunpack.c.l.b16 %v434
        %v648 = vunpack.c.h.b16 %v434
        %v649 = vunpack.c.l.b16 %v435
        %v650 = vunpack.c.h.b16 %v435
        %v651 = vunpack.c.l.b16 %v436
        %v652 = vunpack.c.h.b16 %v436
        %v653 = vunpack.c.l.b16 %v437
        %v654 = vunpack.c.h.b16 %v437
        %v655 = vunpack.c.l.b16 %v438
        %v656 = vunpack.c.h.b16 %v438
        %v657 = vunpack.c.l.b16 %v439
        %v658 = vunpack.c.h.b16 %v439
        %v659 = vunpack.c.l.b16 %v440
        %v660 = vunpack.c.h.b16 %v440
        %v661 = vunpack.c.l.b16 %v441
        %v662 = vunpack.c.h.b16 %v441
        %v663 = vunpack.c.l.b16 %v442
        %v664 = vunpack.c.h.b16 %v442
        %v665 = vunpack.c.l.b16 %v443
        %v666 = vunpack.c.h.b16 %v443
        %v667 = vunpack.c.l.b16 %v444
        %v668 = vunpack.c.h.b16 %v444
        %v669 = vpack.c.b16 %v609, %v605
        %v670 = vpack.c.b16 %v610, %v606
        %v671 = vpack.c.b16 %v611, %v607
        %v672 = vpack.c.b16 %v612, %v608
        %v673 = vpack.c.b16 %v617, %v613
        %v674 = vpack.c.b16 %v618, %v614
        %v675 = vpack.c.b16 %v619, %v615
        %v676 = vpack.c.b16 %v620, %v616
        %v677 = vpack.c.b16 %v625, %v621
        %v678 = vpack.c.b16 %v626, %v622
        %v679 = vpack.c.b16 %v627, %v623
        %v680 = vpack.c.b16 %v628, %v624
        %v681 = vpack.c.b16 %v633, %v629
        %v682 = vpack.c.b16 %v634, %v630
        %v683 = vpack.c.b16 %v635, %v631
        %v684 = vpack.c.b16 %v636, %v632
        %v685 = vpack.c.b16 %v641, %v637
        %v686 = vpack.c.b16 %v642, %v638
        %v687 = vpack.c.b16 %v643, %v639
        %v688 = vpack.c.b16 %v644, %v640
        %v689 = vpack.c.b16 %v649, %v645
        %v690 = vpack.c.b16 %v650, %v646
        %v691 = vpack.c.b16 %v651, %v647
        %v692 = vpack.c.b16 %v652, %v648
        %v693 = vpack.c.b16 %v657, %v653
        %v694 = vpack.c.b16 %v658, %v654
        %v695 = vpack.c.b16 %v659, %v655
        %v696 = vpack.c.b16 %v660, %v656
        %v697 = vpack.c.b16 %v665, %v661
        %v698 = vpack.c.b16 %v666, %v662
        %v699 = vpack.c.b16 %v667, %v663
        %v700 = vpack.c.b16 %v668, %v664
        %733 = vmatprep.subr.bf16.mxu0 %v478
        %734 = vmatpush1.bf16.xpose.msra.mxu0 %v477
        %735 = vmatprep.subr.bf16.mxu0 %v482
        %736 = vmatpush1.bf16.xpose.msra.mxu0 %v481
        %737 = vmatprep.subr.bf16.mxu0 %v486
        %738 = vmatpush1.bf16.xpose.msra.mxu0 %v485
        %739 = vmatprep.subr.bf16.mxu0 %v490
        %740 = vmatpush1.bf16.xpose.msra.mxu0 %v489
        %741 = vmatprep.subr.bf16.mxu0 %v494
        %742 = vmatpush1.bf16.xpose.msra.mxu0 %v493
        %743 = vmatprep.subr.bf16.mxu0 %v498
        %744 = vmatpush1.bf16.xpose.msra.mxu0 %v497
        %745 = vmatprep.subr.bf16.mxu0 %v502
        %746 = vmatpush1.bf16.xpose.msra.mxu0 %v501
        %747 = vmatprep.subr.bf16.mxu0 %v506
        %748 = vmatpush1.bf16.xpose.msra.mxu0 %v505
        %749 = vmatprep.subr.bf16.mxu0 %v510
        %750 = vmatpush1.bf16.xpose.msra.mxu0 %v509
        %751 = vmatprep.subr.bf16.mxu0 %v514
        %752 = vmatpush1.bf16.xpose.msra.mxu0 %v513
        %753 = vmatprep.subr.bf16.mxu0 %v518
        %754 = vmatpush1.bf16.xpose.msra.mxu0 %v517
        %755 = vmatprep.subr.bf16.mxu0 %v522
        %756 = vmatpush1.bf16.xpose.msra.mxu0 %v521
        %757 = vmatprep.subr.bf16.mxu0 %v526
        %758 = vmatpush1.bf16.xpose.msra.mxu0 %v525
        %759 = vmatprep.subr.bf16.mxu0 %v530
        %760 = vmatpush1.bf16.xpose.msra.mxu0 %v529
        %761 = vmatprep.subr.bf16.mxu0 %v534
        %762 = vmatpush1.bf16.xpose.msra.mxu0 %v533
        %763 = vmatprep.subr.bf16.mxu0 %v538
        %764 = vmatpush1.bf16.xpose.msra.mxu0 %v537
        %765 = vmatprep.mubr.bf16.mxu0 %v670
        %766 = vmatmul.mubr.bf16.gmra.mrb[0].mxu0 %v669
        %v767 = vpop.f32.mrb[0].mxu0
        %v768 = vadd.f32 0.0, %v767
        %v769 = vpop.f32.mrb[0].mxu0
        %v770 = vadd.f32 0.0, %v769
        %v771 = vpop.f32.mrb[0].mxu0
        %v772 = vadd.f32 0.0, %v771
        %v773 = vpop.f32.mrb[0].mxu0
        %v774 = vadd.f32 0.0, %v773
        %775 = vmatprep.mubr.bf16.mxu0 %v674
        %776 = vmatmul.mubr.bf16.gmra.mrb[0].mxu0 %v673
        %v777 = vpop.f32.mrb[0].mxu0
        %v778 = vadd.f32 0.0, %v777
        %v779 = vpop.f32.mrb[0].mxu0
        %v780 = vadd.f32 0.0, %v779
        %v781 = vpop.f32.mrb[0].mxu0
        %v782 = vadd.f32 0.0, %v781
        %v783 = vpop.f32.mrb[0].mxu0
        %v784 = vadd.f32 0.0, %v783
        %785 = vmatprep.mubr.bf16.mxu0 %v678
        %786 = vmatmul.mubr.bf16.gmra.mrb[0].mxu0 %v677
        %v787 = vpop.f32.mrb[0].mxu0
        %v788 = vadd.f32 0.0, %v787
        %v789 = vpop.f32.mrb[0].mxu0
        %v790 = vadd.f32 0.0, %v789
        %v791 = vpop.f32.mrb[0].mxu0
        %v792 = vadd.f32 0.0, %v791
        %v793 = vpop.f32.mrb[0].mxu0
        %v794 = vadd.f32 0.0, %v793
        %795 = vmatprep.mubr.bf16.mxu0 %v682
        %796 = vmatmul.mubr.bf16.gmra.mrb[0].mxu0 %v681
        %v797 = vpop.f32.mrb[0].mxu0
        %v798 = vadd.f32 0.0, %v797
        %v799 = vpop.f32.mrb[0].mxu0
        %v800 = vadd.f32 0.0, %v799
        %v801 = vpop.f32.mrb[0].mxu0
        %v802 = vadd.f32 0.0, %v801
        %v803 = vpop.f32.mrb[0].mxu0
        %v804 = vadd.f32 0.0, %v803
        %805 = vmatprep.mubr.bf16.mxu0 %v686
        %806 = vmatmul.mubr.bf16.gmra.mrb[0].mxu0 %v685
        %v807 = vpop.f32.mrb[0].mxu0
        %v808 = vadd.f32 0.0, %v807
        %v809 = vpop.f32.mrb[0].mxu0
        %v810 = vadd.f32 0.0, %v809
        %v811 = vpop.f32.mrb[0].mxu0
        %v812 = vadd.f32 0.0, %v811
        %v813 = vpop.f32.mrb[0].mxu0
        %v814 = vadd.f32 0.0, %v813
        %815 = vmatprep.mubr.bf16.mxu0 %v690
        %816 = vmatmul.mubr.bf16.gmra.mrb[0].mxu0 %v689
        %v817 = vpop.f32.mrb[0].mxu0
        %v818 = vadd.f32 0.0, %v817
        %v819 = vpop.f32.mrb[0].mxu0
        %v820 = vadd.f32 0.0, %v819
        %v821 = vpop.f32.mrb[0].mxu0
        %v822 = vadd.f32 0.0, %v821
        %v823 = vpop.f32.mrb[0].mxu0
        %v824 = vadd.f32 0.0, %v823
        %825 = vmatprep.mubr.bf16.mxu0 %v694
        %826 = vmatmul.mubr.bf16.gmra.mrb[0].mxu0 %v693
        %v827 = vpop.f32.mrb[0].mxu0
        %v828 = vadd.f32 0.0, %v827
        %v829 = vpop.f32.mrb[0].mxu0
        %v830 = vadd.f32 0.0, %v829
        %v831 = vpop.f32.mrb[0].mxu0
        %v832 = vadd.f32 0.0, %v831
        %v833 = vpop.f32.mrb[0].mxu0
        %v834 = vadd.f32 0.0, %v833
        %835 = vmatprep.mubr.bf16.mxu0 %v698
        %836 = vmatmul.mubr.bf16.gmra.mrb[0].mxu0 %v697
        %v837 = vpop.f32.mrb[0].mxu0
        %v838 = vadd.f32 0.0, %v837
        %v839 = vpop.f32.mrb[0].mxu0
        %v840 = vadd.f32 0.0, %v839
        %v841 = vpop.f32.mrb[0].mxu0
        %v842 = vadd.f32 0.0, %v841
        %v843 = vpop.f32.mrb[0].mxu0
        %v844 = vadd.f32 0.0, %v843
        %845 = vdwg.mxu0
        %846 = vmatprep.subr.bf16.mxu0 %v480
        %847 = vmatpush1.bf16.xpose.msra.mxu0 %v479
        %848 = vmatprep.subr.bf16.mxu0 %v484
        %849 = vmatpush1.bf16.xpose.msra.mxu0 %v483
        %850 = vmatprep.subr.bf16.mxu0 %v488
        %851 = vmatpush1.bf16.xpose.msra.mxu0 %v487
        %852 = vmatprep.subr.bf16.mxu0 %v492
        %853 = vmatpush1.bf16.xpose.msra.mxu0 %v491
        %854 = vmatprep.subr.bf16.mxu0 %v496
        %855 = vmatpush1.bf16.xpose.msra.mxu0 %v495
        %856 = vmatprep.subr.bf16.mxu0 %v500
        %857 = vmatpush1.bf16.xpose.msra.mxu0 %v499
        %858 = vmatprep.subr.bf16.mxu0 %v504
        %859 = vmatpush1.bf16.xpose.msra.mxu0 %v503
        %860 = vmatprep.subr.bf16.mxu0 %v508
        %861 = vmatpush1.bf16.xpose.msra.mxu0 %v507
        %862 = vmatprep.subr.bf16.mxu0 %v512
        %863 = vmatpush1.bf16.xpose.msra.mxu0 %v511
        %864 = vmatprep.subr.bf16.mxu0 %v516
        %865 = vmatpush1.bf16.xpose.msra.mxu0 %v515
        %866 = vmatprep.subr.bf16.mxu0 %v520
        %867 = vmatpush1.bf16.xpose.msra.mxu0 %v519
        %868 = vmatprep.subr.bf16.mxu0 %v524
        %869 = vmatpush1.bf16.xpose.msra.mxu0 %v523
        %870 = vmatprep.subr.bf16.mxu0 %v528
        %871 = vmatpush1.bf16.xpose.msra.mxu0 %v527
        %872 = vmatprep.subr.bf16.mxu0 %v532
        %873 = vmatpush1.bf16.xpose.msra.mxu0 %v531
        %874 = vmatprep.subr.bf16.mxu0 %v536
        %875 = vmatpush1.bf16.xpose.msra.mxu0 %v535
        %876 = vmatprep.subr.bf16.mxu0 %v540
        %877 = vmatpush1.bf16.xpose.msra.mxu0 %v539
        %878 = vmatprep.mubr.bf16.mxu0 %v672
        %879 = vmatmul.mubr.bf16.gmra.mrb[0].mxu0 %v671
        %v880 = vpop.f32.mrb[0].mxu0
        %v881 = vadd.f32 %v768, %v880
        %v882 = vpop.f32.mrb[0].mxu0
        %v883 = vadd.f32 %v770, %v882
        %v884 = vpop.f32.mrb[0].mxu0
        %v885 = vadd.f32 %v772, %v884
        %v886 = vpop.f32.mrb[0].mxu0
        %v887 = vadd.f32 %v774, %v886
        %888 = vmatprep.mubr.bf16.mxu0 %v676
        %889 = vmatmul.mubr.bf16.gmra.mrb[0].mxu0 %v675
        %v890 = vpop.f32.mrb[0].mxu0
        %v891 = vadd.f32 %v778, %v890
        %v892 = vpop.f32.mrb[0].mxu0
        %v893 = vadd.f32 %v780, %v892
        %v894 = vpop.f32.mrb[0].mxu0
        %v895 = vadd.f32 %v782, %v894
        %v896 = vpop.f32.mrb[0].mxu0
        %v897 = vadd.f32 %v784, %v896
        %898 = vmatprep.mubr.bf16.mxu0 %v680
        %899 = vmatmul.mubr.bf16.gmra.mrb[0].mxu0 %v679
        %v900 = vpop.f32.mrb[0].mxu0
        %v901 = vadd.f32 %v788, %v900
        %v902 = vpop.f32.mrb[0].mxu0
        %v903 = vadd.f32 %v790, %v902
        %v904 = vpop.f32.mrb[0].mxu0
        %v905 = vadd.f32 %v792, %v904
        %v906 = vpop.f32.mrb[0].mxu0
        %v907 = vadd.f32 %v794, %v906
        %908 = vmatprep.mubr.bf16.mxu0 %v684
        %909 = vmatmul.mubr.bf16.gmra.mrb[0].mxu0 %v683
        %v910 = vpop.f32.mrb[0].mxu0
        %v911 = vadd.f32 %v798, %v910
        %v912 = vpop.f32.mrb[0].mxu0
        %v913 = vadd.f32 %v800, %v912
        %v914 = vpop.f32.mrb[0].mxu0
        %v915 = vadd.f32 %v802, %v914
        %v916 = vpop.f32.mrb[0].mxu0
        %v917 = vadd.f32 %v804, %v916
        %918 = vmatprep.mubr.bf16.mxu0 %v688
        %919 = vmatmul.mubr.bf16.gmra.mrb[0].mxu0 %v687
        %v920 = vpop.f32.mrb[0].mxu0
        %v921 = vadd.f32 %v808, %v920
        %v922 = vpop.f32.mrb[0].mxu0
        %v923 = vadd.f32 %v810, %v922
        %v924 = vpop.f32.mrb[0].mxu0
        %v925 = vadd.f32 %v812, %v924
        %v926 = vpop.f32.mrb[0].mxu0
        %v927 = vadd.f32 %v814, %v926
        %928 = vmatprep.mubr.bf16.mxu0 %v692
        %929 = vmatmul.mubr.bf16.gmra.mrb[0].mxu0 %v691
        %v930 = vpop.f32.mrb[0].mxu0
        %v931 = vadd.f32 %v818, %v930
        %v932 = vpop.f32.mrb[0].mxu0
        %v933 = vadd.f32 %v820, %v932
        %v934 = vpop.f32.mrb[0].mxu0
        %v935 = vadd.f32 %v822, %v934
        %v936 = vpop.f32.mrb[0].mxu0
        %v937 = vadd.f32 %v824, %v936
        %938 = vmatprep.mubr.bf16.mxu0 %v696
        %939 = vmatmul.mubr.bf16.gmra.mrb[0].mxu0 %v695
        %v940 = vpop.f32.mrb[0].mxu0
        %v941 = vadd.f32 %v828, %v940
        %v942 = vpop.f32.mrb[0].mxu0
        %v943 = vadd.f32 %v830, %v942
        %v944 = vpop.f32.mrb[0].mxu0
        %v945 = vadd.f32 %v832, %v944
        %v946 = vpop.f32.mrb[0].mxu0
        %v947 = vadd.f32 %v834, %v946
        %948 = vmatprep.mubr.bf16.mxu0 %v700
        %949 = vmatmul.mubr.bf16.gmra.mrb[0].mxu0 %v699
        %v950 = vpop.f32.mrb[0].mxu0
        %v951 = vadd.f32 %v838, %v950
        %v952 = vpop.f32.mrb[0].mxu0
        %v953 = vadd.f32 %v840, %v952
        %v954 = vpop.f32.mrb[0].mxu0
        %v955 = vadd.f32 %v842, %v954
        %v956 = vpop.f32.mrb[0].mxu0
        %v957 = vadd.f32 %v844, %v956
        %958 = vdwg.mxu0
        %v959 = vadd.f32 %v541, %v881
        %v960 = vadd.f32 %v542, %v883
        %v961 = vadd.f32 %v543, %v885
        %v962 = vadd.f32 %v544, %v887
        %v963 = vadd.f32 %v545, %v891
        %v964 = vadd.f32 %v546, %v893
        %v965 = vadd.f32 %v547, %v895
        %v966 = vadd.f32 %v548, %v897
        %v967 = vadd.f32 %v549, %v901
        %v968 = vadd.f32 %v550, %v903
        %v969 = vadd.f32 %v551, %v905
        %v970 = vadd.f32 %v552, %v907
        %v971 = vadd.f32 %v553, %v911
        %v972 = vadd.f32 %v554, %v913
        %v973 = vadd.f32 %v555, %v915
        %v974 = vadd.f32 %v556, %v917
        %v975 = vadd.f32 %v557, %v921
        %v976 = vadd.f32 %v558, %v923
        %v977 = vadd.f32 %v559, %v925
        %v978 = vadd.f32 %v560, %v927
        %v979 = vadd.f32 %v561, %v931
        %v980 = vadd.f32 %v562, %v933
        %v981 = vadd.f32 %v563, %v935
        %v982 = vadd.f32 %v564, %v937
        %v983 = vadd.f32 %v565, %v941
        %v984 = vadd.f32 %v566, %v943
        %v985 = vadd.f32 %v567, %v945
        %v986 = vadd.f32 %v568, %v947
        %v987 = vadd.f32 %v569, %v951
        %v988 = vadd.f32 %v570, %v953
        %v989 = vadd.f32 %v571, %v955
        %v990 = vadd.f32 %v572, %v957
        %991 = vst [vmem:[#allocation2] sm:$0xff] %v959
        %992 = vst [vmem:[#allocation2 + $0x8] sm:$0xff] %v960
        %993 = vst [vmem:[#allocation2 + $0x10] sm:$0xff] %v961
        %994 = vst [vmem:[#allocation2 + $0x18] sm:$0xff] %v962
        %995 = vst [vmem:[#allocation2 + $0x20] sm:$0xff] %v963
        %996 = vst [vmem:[#allocation2 + $0x28] sm:$0xff] %v964
        %997 = vst [vmem:[#allocation2 + $0x30] sm:$0xff] %v965
        %998 = vst [vmem:[#allocation2 + $0x38] sm:$0xff] %v966
        %999 = vst [vmem:[#allocation2 + $0x40] sm:$0xff] %v967
        %1000 = vst [vmem:[#allocation2 + $0x48] sm:$0xff] %v968
        %1001 = vst [vmem:[#allocation2 + $0x50] sm:$0xff] %v969
        %1002 = vst [vmem:[#allocation2 + $0x58] sm:$0xff] %v970
        %1003 = vst [vmem:[#allocation2 + $0x60] sm:$0xff] %v971
        %1004 = vst [vmem:[#allocation2 + $0x68] sm:$0xff] %v972
        %1005 = vst [vmem:[#allocation2 + $0x70] sm:$0xff] %v973
        %1006 = vst [vmem:[#allocation2 + $0x78] sm:$0xff] %v974
        %1007 = vst [vmem:[#allocation2 + $0x80] sm:$0xff] %v975
        %1008 = vst [vmem:[#allocation2 + $0x88] sm:$0xff] %v976
        %1009 = vst [vmem:[#allocation2 + $0x90] sm:$0xff] %v977
        %1010 = vst [vmem:[#allocation2 + $0x98] sm:$0xff] %v978
        %1011 = vst [vmem:[#allocation2 + $0xa0] sm:$0xff] %v979
        %1012 = vst [vmem:[#allocation2 + $0xa8] sm:$0xff] %v980
        %1013 = vst [vmem:[#allocation2 + $0xb0] sm:$0xff] %v981
        %1014 = vst [vmem:[#allocation2 + $0xb8] sm:$0xff] %v982
        %1015 = vst [vmem:[#allocation2 + $0xc0] sm:$0xff] %v983
        %1016 = vst [vmem:[#allocation2 + $0xc8] sm:$0xff] %v984
        %1017 = vst [vmem:[#allocation2 + $0xd0] sm:$0xff] %v985
        %1018 = vst [vmem:[#allocation2 + $0xd8] sm:$0xff] %v986
        %1019 = vst [vmem:[#allocation2 + $0xe0] sm:$0xff] %v987
        %1020 = vst [vmem:[#allocation2 + $0xe8] sm:$0xff] %v988
        %1021 = vst [vmem:[#allocation2 + $0xf0] sm:$0xff] %v989
        %1022 = vst [vmem:[#allocation2 + $0xf8] sm:$0xff] %v990
        %v1023 = vld [vmem:[#allocation3] sm:$0xff]
        %v1024 = vld [vmem:[#allocation3 + $0x8] sm:$0xff]
        %v1025 = vld [vmem:[#allocation3 + $0x10] sm:$0xff]
        %v1026 = vld [vmem:[#allocation3 + $0x18] sm:$0xff]
        %v1027 = vld [vmem:[#allocation3 + $0x20] sm:$0xff]
        %v1028 = vld [vmem:[#allocation3 + $0x28] sm:$0xff]
        %v1029 = vld [vmem:[#allocation3 + $0x30] sm:$0xff]
        %v1030 = vld [vmem:[#allocation3 + $0x38] sm:$0xff]
        %v1031 = vld [vmem:[#allocation3 + $0x40] sm:$0xff]
        %v1032 = vld [vmem:[#allocation3 + $0x48] sm:$0xff]
        %v1033 = vld [vmem:[#allocation3 + $0x50] sm:$0xff]
        %v1034 = vld [vmem:[#allocation3 + $0x58] sm:$0xff]
        %v1035 = vld [vmem:[#allocation3 + $0x60] sm:$0xff]
        %v1036 = vld [vmem:[#allocation3 + $0x68] sm:$0xff]
        %v1037 = vld [vmem:[#allocation3 + $0x70] sm:$0xff]
        %v1038 = vld [vmem:[#allocation3 + $0x78] sm:$0xff]
        %v1039 = vunpack.c.l.bf16 %v413
        %v1040 = vunpack.c.h.bf16 %v413
        %v1041 = vunpack.c.l.bf16 %v414
        %v1042 = vunpack.c.h.bf16 %v414
        %v1043 = vunpack.c.l.bf16 %v415
        %v1044 = vunpack.c.h.bf16 %v415
        %v1045 = vunpack.c.l.bf16 %v416
        %v1046 = vunpack.c.h.bf16 %v416
        %v1047 = vunpack.c.l.bf16 %v417
        %v1048 = vunpack.c.h.bf16 %v417
        %v1049 = vunpack.c.l.bf16 %v418
        %v1050 = vunpack.c.h.bf16 %v418
        %v1051 = vunpack.c.l.bf16 %v419
        %v1052 = vunpack.c.h.bf16 %v419
        %v1053 = vunpack.c.l.bf16 %v420
        %v1054 = vunpack.c.h.bf16 %v420
        %v1055 = vunpack.c.l.bf16 %v421
        %v1056 = vunpack.c.h.bf16 %v421
        %v1057 = vunpack.c.l.bf16 %v422
        %v1058 = vunpack.c.h.bf16 %v422
        %v1059 = vunpack.c.l.bf16 %v423
        %v1060 = vunpack.c.h.bf16 %v423
        %v1061 = vunpack.c.l.bf16 %v424
        %v1062 = vunpack.c.h.bf16 %v424
        %v1063 = vunpack.c.l.bf16 %v425
        %v1064 = vunpack.c.h.bf16 %v425
        %v1065 = vunpack.c.l.bf16 %v426
        %v1066 = vunpack.c.h.bf16 %v426
        %v1067 = vunpack.c.l.bf16 %v427
        %v1068 = vunpack.c.h.bf16 %v427
        %v1069 = vunpack.c.l.bf16 %v428
        %v1070 = vunpack.c.h.bf16 %v428
        %v1071 = vunpack.c.l.bf16 %v429
        %v1072 = vunpack.c.h.bf16 %v429
        %v1073 = vunpack.c.l.bf16 %v430
        %v1074 = vunpack.c.h.bf16 %v430
        %v1075 = vunpack.c.l.bf16 %v431
        %v1076 = vunpack.c.h.bf16 %v431
        %v1077 = vunpack.c.l.bf16 %v432
        %v1078 = vunpack.c.h.bf16 %v432
        %v1079 = vunpack.c.l.bf16 %v433
        %v1080 = vunpack.c.h.bf16 %v433
        %v1081 = vunpack.c.l.bf16 %v434
        %v1082 = vunpack.c.h.bf16 %v434
        %v1083 = vunpack.c.l.bf16 %v435
        %v1084 = vunpack.c.h.bf16 %v435
        %v1085 = vunpack.c.l.bf16 %v436
        %v1086 = vunpack.c.h.bf16 %v436
        %v1087 = vunpack.c.l.bf16 %v437
        %v1088 = vunpack.c.h.bf16 %v437
        %v1089 = vunpack.c.l.bf16 %v438
        %v1090 = vunpack.c.h.bf16 %v438
        %v1091 = vunpack.c.l.bf16 %v439
        %v1092 = vunpack.c.h.bf16 %v439
        %v1093 = vunpack.c.l.bf16 %v440
        %v1094 = vunpack.c.h.bf16 %v440
        %v1095 = vunpack.c.l.bf16 %v441
        %v1096 = vunpack.c.h.bf16 %v441
        %v1097 = vunpack.c.l.bf16 %v442
        %v1098 = vunpack.c.h.bf16 %v442
        %v1099 = vunpack.c.l.bf16 %v443
        %v1100 = vunpack.c.h.bf16 %v443
        %v1101 = vunpack.c.l.bf16 %v444
        %v1102 = vunpack.c.h.bf16 %v444
        %v1103 = vadd.f32 %v1039, %v1040
        %v1104 = vadd.f32 %v1103, %v1041
        %v1105 = vadd.f32 %v1104, %v1042
        %1106 = vadd.xlane.f32.xlu0 %v1105
        %v1107 = vpop.xlane.xlu0 %1106
        %v1108 = vadd.f32 %v1043, %v1044
        %v1109 = vadd.f32 %v1108, %v1045
        %v1110 = vadd.f32 %v1109, %v1046
        %1111 = vadd.xlane.f32.xlu0 %v1110
        %v1112 = vpop.xlane.xlu0 %1111
        %v1113 = vadd.f32 %v1047, %v1048
        %v1114 = vadd.f32 %v1113, %v1049
        %v1115 = vadd.f32 %v1114, %v1050
        %1116 = vadd.xlane.f32.xlu0 %v1115
        %v1117 = vpop.xlane.xlu0 %1116
        %v1118 = vadd.f32 %v1051, %v1052
        %v1119 = vadd.f32 %v1118, %v1053
        %v1120 = vadd.f32 %v1119, %v1054
        %1121 = vadd.xlane.f32.xlu0 %v1120
        %v1122 = vpop.xlane.xlu0 %1121
        %v1123 = vadd.f32 %v1055, %v1056
        %v1124 = vadd.f32 %v1123, %v1057
        %v1125 = vadd.f32 %v1124, %v1058
        %1126 = vadd.xlane.f32.xlu0 %v1125
        %v1127 = vpop.xlane.xlu0 %1126
        %v1128 = vadd.f32 %v1059, %v1060
        %v1129 = vadd.f32 %v1128, %v1061
        %v1130 = vadd.f32 %v1129, %v1062
        %1131 = vadd.xlane.f32.xlu0 %v1130
        %v1132 = vpop.xlane.xlu0 %1131
        %v1133 = vadd.f32 %v1063, %v1064
        %v1134 = vadd.f32 %v1133, %v1065
        %v1135 = vadd.f32 %v1134, %v1066
        %1136 = vadd.xlane.f32.xlu0 %v1135
        %v1137 = vpop.xlane.xlu0 %1136
        %v1138 = vadd.f32 %v1067, %v1068
        %v1139 = vadd.f32 %v1138, %v1069
        %v1140 = vadd.f32 %v1139, %v1070
        %1141 = vadd.xlane.f32.xlu0 %v1140
        %v1142 = vpop.xlane.xlu0 %1141
        %v1143 = vadd.f32 %v1071, %v1072
        %v1144 = vadd.f32 %v1143, %v1073
        %v1145 = vadd.f32 %v1144, %v1074
        %1146 = vadd.xlane.f32.xlu0 %v1145
        %v1147 = vpop.xlane.xlu0 %1146
        %v1148 = vadd.f32 %v1075, %v1076
        %v1149 = vadd.f32 %v1148, %v1077
        %v1150 = vadd.f32 %v1149, %v1078
        %1151 = vadd.xlane.f32.xlu0 %v1150
        %v1152 = vpop.xlane.xlu0 %1151
        %v1153 = vadd.f32 %v1079, %v1080
        %v1154 = vadd.f32 %v1153, %v1081
        %v1155 = vadd.f32 %v1154, %v1082
        %1156 = vadd.xlane.f32.xlu0 %v1155
        %v1157 = vpop.xlane.xlu0 %1156
        %v1158 = vadd.f32 %v1083, %v1084
        %v1159 = vadd.f32 %v1158, %v1085
        %v1160 = vadd.f32 %v1159, %v1086
        %1161 = vadd.xlane.f32.xlu0 %v1160
        %v1162 = vpop.xlane.xlu0 %1161
        %v1163 = vadd.f32 %v1087, %v1088
        %v1164 = vadd.f32 %v1163, %v1089
        %v1165 = vadd.f32 %v1164, %v1090
        %1166 = vadd.xlane.f32.xlu0 %v1165
        %v1167 = vpop.xlane.xlu0 %1166
        %v1168 = vadd.f32 %v1091, %v1092
        %v1169 = vadd.f32 %v1168, %v1093
        %v1170 = vadd.f32 %v1169, %v1094
        %1171 = vadd.xlane.f32.xlu0 %v1170
        %v1172 = vpop.xlane.xlu0 %1171
        %v1173 = vadd.f32 %v1095, %v1096
        %v1174 = vadd.f32 %v1173, %v1097
        %v1175 = vadd.f32 %v1174, %v1098
        %1176 = vadd.xlane.f32.xlu0 %v1175
        %v1177 = vpop.xlane.xlu0 %1176
        %v1178 = vadd.f32 %v1099, %v1100
        %v1179 = vadd.f32 %v1178, %v1101
        %v1180 = vadd.f32 %v1179, %v1102
        %1181 = vadd.xlane.f32.xlu0 %v1180
        %v1182 = vpop.xlane.xlu0 %1181
        %v1183 = vadd.f32 %v1023, %v1107
        %v1184 = vadd.f32 %v1024, %v1112
        %v1185 = vadd.f32 %v1025, %v1117
        %v1186 = vadd.f32 %v1026, %v1122
        %v1187 = vadd.f32 %v1027, %v1127
        %v1188 = vadd.f32 %v1028, %v1132
        %v1189 = vadd.f32 %v1029, %v1137
        %v1190 = vadd.f32 %v1030, %v1142
        %v1191 = vadd.f32 %v1031, %v1147
        %v1192 = vadd.f32 %v1032, %v1152
        %v1193 = vadd.f32 %v1033, %v1157
        %v1194 = vadd.f32 %v1034, %v1162
        %v1195 = vadd.f32 %v1035, %v1167
        %v1196 = vadd.f32 %v1036, %v1172
        %v1197 = vadd.f32 %v1037, %v1177
        %v1198 = vadd.f32 %v1038, %v1182
        %vm1199 = vcmask 7168
        %1200 = vst.msk [vmem:[#allocation3] sm:$0xff] %vm1199, %v1183
        %1201 = vst.msk [vmem:[#allocation3 + $0x8] sm:$0xff] %vm1199, %v1184
        %1202 = vst.msk [vmem:[#allocation3 + $0x10] sm:$0xff] %vm1199, %v1185
        %1203 = vst.msk [vmem:[#allocation3 + $0x18] sm:$0xff] %vm1199, %v1186
        %1204 = vst.msk [vmem:[#allocation3 + $0x20] sm:$0xff] %vm1199, %v1187
        %1205 = vst.msk [vmem:[#allocation3 + $0x28] sm:$0xff] %vm1199, %v1188
        %1206 = vst.msk [vmem:[#allocation3 + $0x30] sm:$0xff] %vm1199, %v1189
        %1207 = vst.msk [vmem:[#allocation3 + $0x38] sm:$0xff] %vm1199, %v1190
        %1208 = vst.msk [vmem:[#allocation3 + $0x40] sm:$0xff] %vm1199, %v1191
        %1209 = vst.msk [vmem:[#allocation3 + $0x48] sm:$0xff] %vm1199, %v1192
        %1210 = vst.msk [vmem:[#allocation3 + $0x50] sm:$0xff] %vm1199, %v1193
        %1211 = vst.msk [vmem:[#allocation3 + $0x58] sm:$0xff] %vm1199, %v1194
        %1212 = vst.msk [vmem:[#allocation3 + $0x60] sm:$0xff] %vm1199, %v1195
        %1213 = vst.msk [vmem:[#allocation3 + $0x68] sm:$0xff] %vm1199, %v1196
        %1214 = vst.msk [vmem:[#allocation3 + $0x70] sm:$0xff] %vm1199, %v1197
        %1215 = vst.msk [vmem:[#allocation3 + $0x78] sm:$0xff] %vm1199, %v1198
        // Predicated region
        $region53: #{tpu_custom_call.1} parent=39 // pred_check
          %p1216 = pneg %p360
        $region54: #{tpu_custom_call.1} parent=39 // pred_check_branch
          %1218 = sbr.rel (%p1216) target = $region56
        $region55: #{tpu_custom_call.1} parent=39 // pred_region
          %v1219 = vld [vmem:[#allocation2] sm:$0xff]
          %v1220 = vld [vmem:[#allocation2 + $0x8] sm:$0xff]
          %v1221 = vld [vmem:[#allocation2 + $0x10] sm:$0xff]
          %v1222 = vld [vmem:[#allocation2 + $0x18] sm:$0xff]
          %v1223 = vld [vmem:[#allocation2 + $0x20] sm:$0xff]
          %v1224 = vld [vmem:[#allocation2 + $0x28] sm:$0xff]
          %v1225 = vld [vmem:[#allocation2 + $0x30] sm:$0xff]
          %v1226 = vld [vmem:[#allocation2 + $0x38] sm:$0xff]
          %v1227 = vld [vmem:[#allocation2 + $0x40] sm:$0xff]
          %v1228 = vld [vmem:[#allocation2 + $0x48] sm:$0xff]
          %v1229 = vld [vmem:[#allocation2 + $0x50] sm:$0xff]
          %v1230 = vld [vmem:[#allocation2 + $0x58] sm:$0xff]
          %v1231 = vld [vmem:[#allocation2 + $0x60] sm:$0xff]
          %v1232 = vld [vmem:[#allocation2 + $0x68] sm:$0xff]
          %v1233 = vld [vmem:[#allocation2 + $0x70] sm:$0xff]
          %v1234 = vld [vmem:[#allocation2 + $0x78] sm:$0xff]
          %v1235 = vld [vmem:[#allocation2 + $0x80] sm:$0xff]
          %v1236 = vld [vmem:[#allocation2 + $0x88] sm:$0xff]
          %v1237 = vld [vmem:[#allocation2 + $0x90] sm:$0xff]
          %v1238 = vld [vmem:[#allocation2 + $0x98] sm:$0xff]
          %v1239 = vld [vmem:[#allocation2 + $0xa0] sm:$0xff]
          %v1240 = vld [vmem:[#allocation2 + $0xa8] sm:$0xff]
          %v1241 = vld [vmem:[#allocation2 + $0xb0] sm:$0xff]
          %v1242 = vld [vmem:[#allocation2 + $0xb8] sm:$0xff]
          %v1243 = vld [vmem:[#allocation2 + $0xc0] sm:$0xff]
          %v1244 = vld [vmem:[#allocation2 + $0xc8] sm:$0xff]
          %v1245 = vld [vmem:[#allocation2 + $0xd0] sm:$0xff]
          %v1246 = vld [vmem:[#allocation2 + $0xd8] sm:$0xff]
          %v1247 = vld [vmem:[#allocation2 + $0xe0] sm:$0xff]
          %v1248 = vld [vmem:[#allocation2 + $0xe8] sm:$0xff]
          %v1249 = vld [vmem:[#allocation2 + $0xf0] sm:$0xff]
          %v1250 = vld [vmem:[#allocation2 + $0xf8] sm:$0xff]
          %v1251 = vld [vmem:[%s346] sm:$0x3]
          %v1253 = vlaneseq
          %v1254 = vshrl.u32 %v1253, 7
          %v1255 = vsub.s32 0, %v1254
          %v1256 = vrot.slane %v1251, %v1255
          %v1257 = vlaneseq
          %v1258 = vshrl.u32 %v1257, 7
          %v1259 = vsub.s32 1, %v1258
          %v1260 = vrot.slane %v1251, %v1259
          %v1263 = vmul.f32 %v1219, %v1256
          %v1264 = vmul.f32 %v1220, %v1260
          %v1265 = vmul.f32 %v1221, %v1256
          %v1266 = vmul.f32 %v1222, %v1260
          %v1267 = vmul.f32 %v1223, %v1256
          %v1268 = vmul.f32 %v1224, %v1260
          %v1269 = vmul.f32 %v1225, %v1256
          %v1270 = vmul.f32 %v1226, %v1260
          %v1271 = vmul.f32 %v1227, %v1256
          %v1272 = vmul.f32 %v1228, %v1260
          %v1273 = vmul.f32 %v1229, %v1256
          %v1274 = vmul.f32 %v1230, %v1260
          %v1275 = vmul.f32 %v1231, %v1256
          %v1276 = vmul.f32 %v1232, %v1260
          %v1277 = vmul.f32 %v1233, %v1256
          %v1278 = vmul.f32 %v1234, %v1260
          %v1279 = vmul.f32 %v1235, %v1256
          %v1280 = vmul.f32 %v1236, %v1260
          %v1281 = vmul.f32 %v1237, %v1256
          %v1282 = vmul.f32 %v1238, %v1260
          %v1283 = vmul.f32 %v1239, %v1256
          %v1284 = vmul.f32 %v1240, %v1260
          %v1285 = vmul.f32 %v1241, %v1256
          %v1286 = vmul.f32 %v1242, %v1260
          %v1287 = vmul.f32 %v1243, %v1256
          %v1288 = vmul.f32 %v1244, %v1260
          %v1289 = vmul.f32 %v1245, %v1256
          %v1290 = vmul.f32 %v1246, %v1260
          %v1291 = vmul.f32 %v1247, %v1256
          %v1292 = vmul.f32 %v1248, %v1260
          %v1293 = vmul.f32 %v1249, %v1256
          %v1294 = vmul.f32 %v1250, %v1260
          %v1295 = vld [vmem:[#allocation3] sm:$0xff]
          %v1296 = vld [vmem:[#allocation3 + $0x8] sm:$0xff]
          %v1297 = vld [vmem:[#allocation3 + $0x10] sm:$0xff]
          %v1298 = vld [vmem:[#allocation3 + $0x18] sm:$0xff]
          %v1299 = vld [vmem:[#allocation3 + $0x20] sm:$0xff]
          %v1300 = vld [vmem:[#allocation3 + $0x28] sm:$0xff]
          %v1301 = vld [vmem:[#allocation3 + $0x30] sm:$0xff]
          %v1302 = vld [vmem:[#allocation3 + $0x38] sm:$0xff]
          %v1303 = vld [vmem:[#allocation3 + $0x40] sm:$0xff]
          %v1304 = vld [vmem:[#allocation3 + $0x48] sm:$0xff]
          %v1305 = vld [vmem:[#allocation3 + $0x50] sm:$0xff]
          %v1306 = vld [vmem:[#allocation3 + $0x58] sm:$0xff]
          %v1307 = vld [vmem:[#allocation3 + $0x60] sm:$0xff]
          %v1308 = vld [vmem:[#allocation3 + $0x68] sm:$0xff]
          %v1309 = vld [vmem:[#allocation3 + $0x70] sm:$0xff]
          %v1310 = vld [vmem:[#allocation3 + $0x78] sm:$0xff]
          %v1311 = vld [vmem:[%s351] sm:$0x3]
          %1313 = vset.pattern.permute.xlu0 0
          %1314 = vperm.xlu0 %1313, %v1295
          %v1315 = vpop.permute.xlu0 %1314
          %1318 = vset.pattern.permute.xlu0 0
          %1319 = vperm.xlu0 %1318, %v1296
          %v1320 = vpop.permute.xlu0 %1319
          %1323 = vset.pattern.permute.xlu0 0
          %1324 = vperm.xlu0 %1323, %v1297
          %v1325 = vpop.permute.xlu0 %1324
          %1328 = vset.pattern.permute.xlu0 0
          %1329 = vperm.xlu0 %1328, %v1298
          %v1330 = vpop.permute.xlu0 %1329
          %1333 = vset.pattern.permute.xlu0 0
          %1334 = vperm.xlu0 %1333, %v1299
          %v1335 = vpop.permute.xlu0 %1334
          %1338 = vset.pattern.permute.xlu0 0
          %1339 = vperm.xlu0 %1338, %v1300
          %v1340 = vpop.permute.xlu0 %1339
          %1343 = vset.pattern.permute.xlu0 0
          %1344 = vperm.xlu0 %1343, %v1301
          %v1345 = vpop.permute.xlu0 %1344
          %1348 = vset.pattern.permute.xlu0 0
          %1349 = vperm.xlu0 %1348, %v1302
          %v1350 = vpop.permute.xlu0 %1349
          %1353 = vset.pattern.permute.xlu0 0
          %1354 = vperm.xlu0 %1353, %v1303
          %v1355 = vpop.permute.xlu0 %1354
          %1358 = vset.pattern.permute.xlu0 0
          %1359 = vperm.xlu0 %1358, %v1304
          %v1360 = vpop.permute.xlu0 %1359
          %1363 = vset.pattern.permute.xlu0 0
          %1364 = vperm.xlu0 %1363, %v1305
          %v1365 = vpop.permute.xlu0 %1364
          %1368 = vset.pattern.permute.xlu0 0
          %1369 = vperm.xlu0 %1368, %v1306
          %v1370 = vpop.permute.xlu0 %1369
          %1373 = vset.pattern.permute.xlu0 0
          %1374 = vperm.xlu0 %1373, %v1307
          %v1375 = vpop.permute.xlu0 %1374
          %1378 = vset.pattern.permute.xlu0 0
          %1379 = vperm.xlu0 %1378, %v1308
          %v1380 = vpop.permute.xlu0 %1379
          %1383 = vset.pattern.permute.xlu0 0
          %1384 = vperm.xlu0 %1383, %v1309
          %v1385 = vpop.permute.xlu0 %1384
          %1388 = vset.pattern.permute.xlu0 0
          %1389 = vperm.xlu0 %1388, %v1310
          %v1390 = vpop.permute.xlu0 %1389
          %v1393 = vlaneseq
          %v1394 = vshrl.u32 %v1393, 7
          %v1395 = vsub.s32 0, %v1394
          %v1396 = vrot.slane %v1311, %v1395
          %v1397 = vlaneseq
          %v1398 = vshrl.u32 %v1397, 7
          %v1399 = vsub.s32 1, %v1398
          %v1400 = vrot.slane %v1311, %v1399
          %v1403 = vmul.f32 %v1315, %v1396
          %v1404 = vmul.f32 %v1315, %v1400
          %v1405 = vmul.f32 %v1320, %v1396
          %v1406 = vmul.f32 %v1320, %v1400
          %v1407 = vmul.f32 %v1325, %v1396
          %v1408 = vmul.f32 %v1325, %v1400
          %v1409 = vmul.f32 %v1330, %v1396
          %v1410 = vmul.f32 %v1330, %v1400
          %v1411 = vmul.f32 %v1335, %v1396
          %v1412 = vmul.f32 %v1335, %v1400
          %v1413 = vmul.f32 %v1340, %v1396
          %v1414 = vmul.f32 %v1340, %v1400
          %v1415 = vmul.f32 %v1345, %v1396
          %v1416 = vmul.f32 %v1345, %v1400
          %v1417 = vmul.f32 %v1350, %v1396
          %v1418 = vmul.f32 %v1350, %v1400
          %v1419 = vmul.f32 %v1355, %v1396
          %v1420 = vmul.f32 %v1355, %v1400
          %v1421 = vmul.f32 %v1360, %v1396
          %v1422 = vmul.f32 %v1360, %v1400
          %v1423 = vmul.f32 %v1365, %v1396
          %v1424 = vmul.f32 %v1365, %v1400
          %v1425 = vmul.f32 %v1370, %v1396
          %v1426 = vmul.f32 %v1370, %v1400
          %v1427 = vmul.f32 %v1375, %v1396
          %v1428 = vmul.f32 %v1375, %v1400
          %v1429 = vmul.f32 %v1380, %v1396
          %v1430 = vmul.f32 %v1380, %v1400
          %v1431 = vmul.f32 %v1385, %v1396
          %v1432 = vmul.f32 %v1385, %v1400
          %v1433 = vmul.f32 %v1390, %v1396
          %v1434 = vmul.f32 %v1390, %v1400
          %v1435 = vsub.f32 %v1263, %v1403
          %v1436 = vsub.f32 %v1264, %v1404
          %v1437 = vsub.f32 %v1265, %v1405
          %v1438 = vsub.f32 %v1266, %v1406
          %v1439 = vsub.f32 %v1267, %v1407
          %v1440 = vsub.f32 %v1268, %v1408
          %v1441 = vsub.f32 %v1269, %v1409
          %v1442 = vsub.f32 %v1270, %v1410
          %v1443 = vsub.f32 %v1271, %v1411
          %v1444 = vsub.f32 %v1272, %v1412
          %v1445 = vsub.f32 %v1273, %v1413
          %v1446 = vsub.f32 %v1274, %v1414
          %v1447 = vsub.f32 %v1275, %v1415
          %v1448 = vsub.f32 %v1276, %v1416
          %v1449 = vsub.f32 %v1277, %v1417
          %v1450 = vsub.f32 %v1278, %v1418
          %v1451 = vsub.f32 %v1279, %v1419
          %v1452 = vsub.f32 %v1280, %v1420
          %v1453 = vsub.f32 %v1281, %v1421
          %v1454 = vsub.f32 %v1282, %v1422
          %v1455 = vsub.f32 %v1283, %v1423
          %v1456 = vsub.f32 %v1284, %v1424
          %v1457 = vsub.f32 %v1285, %v1425
          %v1458 = vsub.f32 %v1286, %v1426
          %v1459 = vsub.f32 %v1287, %v1427
          %v1460 = vsub.f32 %v1288, %v1428
          %v1461 = vsub.f32 %v1289, %v1429
          %v1462 = vsub.f32 %v1290, %v1430
          %v1463 = vsub.f32 %v1291, %v1431
          %v1464 = vsub.f32 %v1292, %v1432
          %v1465 = vsub.f32 %v1293, %v1433
          %v1466 = vsub.f32 %v1294, %v1434
          %v1467 = vld [vmem:[%s356] sm:$0x3]
          %v1469 = vlaneseq
          %v1470 = vshrl.u32 %v1469, 7
          %v1471 = vsub.s32 0, %v1470
          %v1472 = vrot.slane %v1467, %v1471
          %v1473 = vlaneseq
          %v1474 = vshrl.u32 %v1473, 7
          %v1475 = vsub.s32 1, %v1474
          %v1476 = vrot.slane %v1467, %v1475
          %v1479 = vadd.f32 %v1435, %v1472
          %v1480 = vadd.f32 %v1436, %v1476
          %v1481 = vadd.f32 %v1437, %v1472
          %v1482 = vadd.f32 %v1438, %v1476
          %v1483 = vadd.f32 %v1439, %v1472
          %v1484 = vadd.f32 %v1440, %v1476
          %v1485 = vadd.f32 %v1441, %v1472
          %v1486 = vadd.f32 %v1442, %v1476
          %v1487 = vadd.f32 %v1443, %v1472
          %v1488 = vadd.f32 %v1444, %v1476
          %v1489 = vadd.f32 %v1445, %v1472
          %v1490 = vadd.f32 %v1446, %v1476
          %v1491 = vadd.f32 %v1447, %v1472
          %v1492 = vadd.f32 %v1448, %v1476
          %v1493 = vadd.f32 %v1449, %v1472
          %v1494 = vadd.f32 %v1450, %v1476
          %v1495 = vadd.f32 %v1451, %v1472
          %v1496 = vadd.f32 %v1452, %v1476
          %v1497 = vadd.f32 %v1453, %v1472
          %v1498 = vadd.f32 %v1454, %v1476
          %v1499 = vadd.f32 %v1455, %v1472
          %v1500 = vadd.f32 %v1456, %v1476
          %v1501 = vadd.f32 %v1457, %v1472
          %v1502 = vadd.f32 %v1458, %v1476
          %v1503 = vadd.f32 %v1459, %v1472
          %v1504 = vadd.f32 %v1460, %v1476
          %v1505 = vadd.f32 %v1461, %v1472
          %v1506 = vadd.f32 %v1462, %v1476
          %v1507 = vadd.f32 %v1463, %v1472
          %v1508 = vadd.f32 %v1464, %v1476
          %v1509 = vadd.f32 %v1465, %v1472
          %v1510 = vadd.f32 %v1466, %v1476
          %1511 = vst [vmem:[%s338] sm:$0xff] %v1479
          %1512 = vst [vmem:[%s338 + $0x8] sm:$0xff] %v1480
          %1513 = vst [vmem:[%s338 + $0x10] sm:$0xff] %v1481
          %1514 = vst [vmem:[%s338 + $0x18] sm:$0xff] %v1482
          %1515 = vst [vmem:[%s338 + $0x20] sm:$0xff] %v1483
          %1516 = vst [vmem:[%s338 + $0x28] sm:$0xff] %v1484
          %1517 = vst [vmem:[%s338 + $0x30] sm:$0xff] %v1485
          %1518 = vst [vmem:[%s338 + $0x38] sm:$0xff] %v1486
          %1519 = vst [vmem:[%s338 + $0x40] sm:$0xff] %v1487
          %1520 = vst [vmem:[%s338 + $0x48] sm:$0xff] %v1488
          %1521 = vst [vmem:[%s338 + $0x50] sm:$0xff] %v1489
          %1522 = vst [vmem:[%s338 + $0x58] sm:$0xff] %v1490
          %1523 = vst [vmem:[%s338 + $0x60] sm:$0xff] %v1491
          %1524 = vst [vmem:[%s338 + $0x68] sm:$0xff] %v1492
          %1525 = vst [vmem:[%s338 + $0x70] sm:$0xff] %v1493
          %1526 = vst [vmem:[%s338 + $0x78] sm:$0xff] %v1494
          %1527 = vst [vmem:[%s338 + $0x80] sm:$0xff] %v1495
          %1528 = vst [vmem:[%s338 + $0x88] sm:$0xff] %v1496
          %1529 = vst [vmem:[%s338 + $0x90] sm:$0xff] %v1497
          %1530 = vst [vmem:[%s338 + $0x98] sm:$0xff] %v1498
          %1531 = vst [vmem:[%s338 + $0xa0] sm:$0xff] %v1499
          %1532 = vst [vmem:[%s338 + $0xa8] sm:$0xff] %v1500
          %1533 = vst [vmem:[%s338 + $0xb0] sm:$0xff] %v1501
          %1534 = vst [vmem:[%s338 + $0xb8] sm:$0xff] %v1502
          %1535 = vst [vmem:[%s338 + $0xc0] sm:$0xff] %v1503
          %1536 = vst [vmem:[%s338 + $0xc8] sm:$0xff] %v1504
          %1537 = vst [vmem:[%s338 + $0xd0] sm:$0xff] %v1505
          %1538 = vst [vmem:[%s338 + $0xd8] sm:$0xff] %v1506
          %1539 = vst [vmem:[%s338 + $0xe0] sm:$0xff] %v1507
          %1540 = vst [vmem:[%s338 + $0xe8] sm:$0xff] %v1508
          %1541 = vst [vmem:[%s338 + $0xf0] sm:$0xff] %v1509
          %1542 = vst [vmem:[%s338 + $0xf8] sm:$0xff] %v1510
        $region56: #{tpu_custom_call.1} parent=39 // pred_fallthru
          _
        %s1543 = sand.u32 %s186, 1
        %s1544 = scalar_lea.sflag [#allocation6], %s1543
        %s1545 = sand.u32 %s186, 1
        %s1546 = smul.addr %s1545, 256
        %s1547 = scalar_lea.vmem [#allocation9], %s1546
        // Predicated region
        $region57: #{tpu_custom_call.1} parent=39 // pred_check
          %p1548 = pneg %p196
        $region58: #{tpu_custom_call.1} parent=39 // pred_check_branch
          %1550 = sbr.rel (%p1548) target = $region60
        $region59: #{tpu_custom_call.1} parent=39 // pred_region
          %s1551 = smul.u32 16, %s28
          %s1552 = smul.u32 2, %s29
          %s1554 = ssub.s32 4096, 4096
          %1555 = vsyncadd %s1544, %s1554
          %s1556 = smul.addr %s1551, 4
          %s1557 = sadd.s32 %s1552, %s1556
          %s1558 = smul.addr %s1557, 128
          %s1559 = scalar_lea.hbm %s5, %s1558
          %s1560 = sshll.u32 %s1547, 4
          %s1561 = int_to_ptr.vmem [resolvable:$true] %s1560
          %1566 = dma.vmem_to_hbm [thread:$0]  %s1561, 4096, %s1559, %s1544, 256, 512, 16
        $region60: #{tpu_custom_call.1} parent=39 // pred_fallthru
          _
      $region40: #{tpu_custom_call.1} parent=5 // pred_fallthru
        _
      %p1567 = scmp.le.s32.totalorder 2, %s18
      // Predicated region
      $region61: #{tpu_custom_call.1} parent=5 // pred_check
        %p1568 = pneg %p1567
      $region62: #{tpu_custom_call.1} parent=5 // pred_check_branch
        %1570 = sbr.rel (%p1568) target = $region64
      $region63: #{tpu_custom_call.1} parent=5 // pred_region
        %s1571 = ssub.s32 %s18, 2
        // Predicated region
        $region65: #{tpu_custom_call.1} parent=63 // pred_check
          %p1572 = pneg %p202
        $region66: #{tpu_custom_call.1} parent=63 // pred_check_branch
          %1574 = sbr.rel (%p1572) target = $region68
        $region67: #{tpu_custom_call.1} parent=63 // pred_region
          %s1575 = sand.u32 %s187, 1
          %s1576 = scalar_lea.sflag [#allocation6], %s1575
          %s1577 = sand.u32 %s187, 1
          %s1578 = smul.addr %s1577, 256
          %s1579 = scalar_lea.vmem [#allocation9], %s1578
          %1580 = dma.done %s1576, 4096
        $region68: #{tpu_custom_call.1} parent=63 // pred_fallthru
          _
      $region64: #{tpu_custom_call.1} parent=5 // pred_fallthru
        _
    $region6: #{tpu_custom_call.1} parent=1 // loop_footer
      %s22 = sadd.s32 1, %s18
    $region7: #{tpu_custom_call.1} parent=1 // loop_footer_branch
      %17 = sbr.rel target = $region3
    $region8: #{tpu_custom_call.1} parent=1 // loop_exit
      _
    %1581 = vsyncpa [#allocation5], 1
    %s1582 = scalar_lea.sflag [#allocation5], 1
    %1583 = vsyncpa %s1582, 1
    %1584 = vsyncpa [#allocation8], 1
    %s1585 = scalar_lea.sflag [#allocation8], 1
    %1586 = vsyncpa %s1585, 1
    %1587 = vsyncpa [#allocation6], 1
    %s1588 = scalar_lea.sflag [#allocation6], 1
    %1589 = vsyncpa %s1588, 1

</llo_original>
